<compile_context>
chip_gen: v6e
topology: v6e:2x2x1
jax: 0.10.0
libtpu: 0.0.40
codegen_flags: <defaults>
</compile_context>

<pallas_src>
import jax
import jax.numpy as jnp
from jax.experimental import pallas as pl
from jax.experimental.pallas import tpu as pltpu

BN_EPS = 1e-5
COMPUTE_DTYPE = jnp.bfloat16   # MXU input dtype; accumulation stays f32.


# ---------------------------------------------------------------------------
# Kernels
# ---------------------------------------------------------------------------
def _conv3(x, w_ref, b_ref):
    """'same' conv1d (kernel 3) on (L, Cin) bf16 activations -> (L, Cout) f32.

    out[l] = x[l-1] @ w[0] + x[l] @ w[1] + x[l+1] @ w[2] + b, zero-padded at
    the sequence edges.  The prev/next tap contributions are computed as
    unshifted matmuls, rotated by one row with pltpu.roll (XLU) and the single
    wrapped boundary row of each is masked to zero.
    """
    L = x.shape[0]
    y_prev = jnp.dot(x, w_ref[0], preferred_element_type=jnp.float32)
    y_mid = jnp.dot(x, w_ref[1], preferred_element_type=jnp.float32)
    y_next = jnp.dot(x, w_ref[2], preferred_element_type=jnp.float32)

    row = jax.lax.broadcasted_iota(jnp.int32, y_mid.shape, 0)
    # roll(+1): row l picks up y_prev[l-1] = x[l-1] @ w[0]; row 0 wraps -> mask.
    prev = jnp.where(row > 0, pltpu.roll(y_prev, 1, axis=0), 0.0)
    # roll(L-1) == roll(-1): row l picks up y_next[l+1]; row L-1 wraps -> mask.
    nxt = jnp.where(row < L - 1, pltpu.roll(y_next, L - 1, axis=0), 0.0)
    return y_mid + prev + nxt + b_ref[...]


def _resblock_proj_kernel(x_ref, w1_ref, b1_ref, w2_ref, b2_ref,
                          wr_ref, br_ref, out_ref):
    """ResBlock with a 1x1-conv projection residual path."""
    x = x_ref[0]                                              # (L, Cin) bf16
    h = jnp.maximum(_conv3(x, w1_ref, b1_ref), 0.0)           # conv1+bn1+relu
    h = h.astype(COMPUTE_DTYPE)                               # bf16 into MXU
    y = _conv3(h, w2_ref, b2_ref)                             # conv2+bn2 (f32)
    res = jnp.dot(x, wr_ref[...],
                  preferred_element_type=jnp.float32) + br_ref[...]
    out_ref[0] = jnp.maximum(y + res, 0.0).astype(out_ref.dtype)


def _resblock_id_kernel(x_ref, w1_ref, b1_ref, w2_ref, b2_ref, out_ref):
    """ResBlock with an identity residual path (Cin == Cout, stride 1)."""
    x = x_ref[0]                                              # (L, C) bf16
    h = jnp.maximum(_conv3(x, w1_ref, b1_ref), 0.0).astype(COMPUTE_DTYPE)
    y = _conv3(h, w2_ref, b2_ref)
    out_ref[0] = jnp.maximum(y + x.astype(jnp.float32), 0.0).astype(out_ref.dtype)


# ---------------------------------------------------------------------------
# Pallas wrapper for one ResBlock
# ---------------------------------------------------------------------------
def resblock_pallas(x_blc, p):
    """x_blc: (B, L, Cin) bf16; p: BN-folded (bf16 weights / f32 bias) params."""
    B, L, Cin = x_blc.shape
    Cout = p["w1"].shape[-1]
    has_proj = "wr" in p

    inputs = [x_blc, p["w1"], p["b1"], p["w2"], p["b2"]]
    in_specs = [
        pl.BlockSpec((1, L, Cin), lambda b: (b, 0, 0)),       # activations
        pl.BlockSpec((3, Cin, Cout), lambda b: (0, 0, 0)),    # conv1 (resident)
        pl.BlockSpec((1, Cout), lambda b: (0, 0)),
        pl.BlockSpec((3, Cout, Cout), lambda b: (0, 0, 0)),   # conv2 (resident)
        pl.BlockSpec((1, Cout), lambda b: (0, 0)),
    ]
    if has_proj:
        inputs += [p["wr"], p["br"]]
        in_specs += [
            pl.BlockSpec((Cin, Cout), lambda b: (0, 0)),      # 1x1 residual conv
            pl.BlockSpec((1, Cout), lambda b: (0, 0)),
        ]
        kernel = _resblock_proj_kernel
    else:
        kernel = _resblock_id_kernel

    flops = 2 * B * L * (3 * Cin * Cout + 3 * Cout * Cout
                         + (Cin * Cout if has_proj else 0))
    bytes_accessed = (int(x_blc.size) * x_blc.dtype.itemsize
                      + B * L * Cout * x_blc.dtype.itemsize
                      + sum(int(a.size) * a.dtype.itemsize for a in inputs[1:]))

    # VMEM budget: (double-buffered) resident weights + in/out activation
    # blocks + headroom for the f32 conv accumulators.  Floor at 32 MiB so we
    # never request less than the typical default; cap well below physical.
    w_bytes = sum(int(a.size) * a.dtype.itemsize for a in inputs[1:])
    act_bytes = L * (Cin + Cout) * x_blc.dtype.itemsize
    acc_bytes = 8 * L * Cout * 4
    vmem_limit = int(min(48 * 1024 * 1024,
                         max(32 * 1024 * 1024,
                             2 * w_bytes + 2 * act_bytes + acc_bytes
                             + 8 * 1024 * 1024)))

    return pl.pallas_call(
        kernel,
        out_shape=jax.ShapeDtypeStruct((B, L, Cout), x_blc.dtype),
        grid_spec=pltpu.PrefetchScalarGridSpec(
            num_scalar_prefetch=0,
            grid=(B,),
            in_specs=in_specs,
            out_specs=pl.BlockSpec((1, L, Cout), lambda b: (b, 0, 0)),
        ),
        compiler_params=pltpu.CompilerParams(
            dimension_semantics=("parallel",),
            vmem_limit_bytes=vmem_limit),
        cost_estimate=pl.CostEstimate(
            flops=flops, transcendentals=0, bytes_accessed=bytes_accessed),
    )(*inputs)


# ---------------------------------------------------------------------------
# Parameter init (PyTorch-like) and BN folding
# ---------------------------------------------------------------------------
def init_conv(key, cin, cout, k):
    bound = 1.0 / (cin * k) ** 0.5
    kw, kb = jax.random.split(key)
    w = jax.random.uniform(kw, (cout, cin, k), minval=-bound, maxval=bound,
                           dtype=jnp.float32)
    b = jax.random.uniform(kb, (cout,), minval=-bound, maxval=bound,
                           dtype=jnp.float32)
    return w, b


def init_bn(key, c):
    kg, kb, km, kv = jax.random.split(key, 4)
    return dict(
        gamma=jax.random.uniform(kg, (c,), minval=0.5, maxval=1.5,
                                 dtype=jnp.float32),
        beta=0.1 * jax.random.normal(kb, (c,), dtype=jnp.float32),
        mean=0.1 * jax.random.normal(km, (c,), dtype=jnp.float32),
        var=jax.random.uniform(kv, (c,), minval=0.5, maxval=1.5,
                               dtype=jnp.float32),
    )


def init_resblock(key, cin, cout):
    ks = jax.random.split(key, 6)
    blk = dict(conv1=init_conv(ks[0], cin, cout, 3), bn1=init_bn(ks[1], cout),
               conv2=init_conv(ks[2], cout, cout, 3), bn2=init_bn(ks[3], cout))
    if cin != cout:                       # stride is always 1 in HandCraft_v1
        blk["convr"] = init_conv(ks[4], cin, cout, 1)
        blk["bnr"] = init_bn(ks[5], cout)
    return blk


def fold_conv_bn(conv, bn, eps=BN_EPS):
    """Fold eval-mode BatchNorm into the preceding conv (exact algebra, f32)."""
    w, b = conv                                               # (Cout,Cin,K), (Cout,)
    scale = bn["gamma"] / jnp.sqrt(bn["var"] + eps)           # (Cout,)
    w_f = jnp.transpose(w, (2, 1, 0)) * scale[None, None, :]  # (K, Cin, Cout)
    b_f = (b - bn["mean"]) * scale + bn["beta"]               # (Cout,)
    return w_f, b_f.reshape(1, -1)


def fold_block(blk, compute_dtype=COMPUTE_DTYPE):
    """Fold BN in f32, then cast the matmul weights to the MXU input dtype."""
    w1, b1 = fold_conv_bn(blk["conv1"], blk["bn1"])
    w2, b2 = fold_conv_bn(blk["conv2"], blk["bn2"])
    p = dict(w1=w1.astype(compute_dtype), b1=b1,
             w2=w2.astype(compute_dtype), b2=b2)
    if "convr" in blk:
        wr, br = fold_conv_bn(blk["convr"], blk["bnr"])
        p["wr"] = wr[0].astype(compute_dtype)   # K = 1 -> (Cin, Cout)
        p["br"] = br
    return p


# ---------------------------------------------------------------------------
# Full HandCraft_v1 forward (Pallas) and a pure-JAX reference
# ---------------------------------------------------------------------------
def handcraft_forward(x_bcl, blocks):
    """x_bcl: (B, C_in, L) (PyTorch layout) -> (B, C_out, L)."""
    out_dtype = x_bcl.dtype
    x = jnp.transpose(x_bcl, (0, 2, 1)).astype(COMPUTE_DTYPE)  # (B, L, C)
    for blk in blocks:
        x = resblock_pallas(x, fold_block(blk))
        # nn.Dropout(p=conv_dropout) after the last blocks is the identity for
        # the default conv_dropout=0.0 and is omitted.
    return jnp.transpose(x, (0, 2, 1)).astype(out_dtype)


def _conv1d_ref(x, w, b, pad):
    y = jax.lax.conv_general_dilated(
        x, w, window_strides=(1,), padding=[(pad, pad)],
        dimension_numbers=("NCH", "OIH", "NCH"),
        precision=jax.lax.Precision.HIGHEST)
    return y + b[None, :, None]


def _bn_ref(x, bn, eps=BN_EPS):
    return ((x - bn["mean"][None, :, None])
            / jnp.sqrt(bn["var"][None, :, None] + eps)
            * bn["gamma"][None, :, None] + bn["beta"][None, :, None])


def handcraft_reference(x, blocks):
    for blk in blocks:
        h = jnp.maximum(_bn_ref(_conv1d_ref(x, *blk["conv1"], 1), blk["bn1"]), 0.0)
        y = _bn_ref(_conv1d_ref(h, *blk["conv2"], 1), blk["bn2"])
        if "convr" in blk:
            r = _bn_ref(_conv1d_ref(x, *blk["convr"], 0), blk["bnr"])
        else:
            r = x
        x = jnp.maximum(y + r, 0.0)
    return x


if __name__ == "__main__":
    # Small, structure-preserving config (original: 8->512, 512->512,
    # 512->1024, then 2x 1024->1024; scaled down so the test is quick).
    # All channel widths are multiples of 128 so output stores stay lane-dense.
    B, L = 2, 128
    widths = [(8, 128), (128, 128), (128, 256), (256, 256), (256, 256)]

    root = jax.random.PRNGKey(0)
    kx, kp = jax.random.split(root)
    x = jax.random.normal(kx, (B, widths[0][0], L), dtype=jnp.float32)

    blocks = [init_resblock(jax.random.fold_in(kp, i), cin, cout)
              for i, (cin, cout) in enumerate(widths)]

    out = jax.block_until_ready(handcraft_forward(x, blocks))
    assert out.shape == (B, widths[-1][1], L), out.shape

    ref = handcraft_reference(x, blocks)
    abs_err = float(jnp.max(jnp.abs(out - ref)))
    ref_scale = float(jnp.max(jnp.abs(ref))) + 1e-6
    rel_err = abs_err / ref_scale
    # bf16 MXU inputs with f32 accumulation vs. a Precision.HIGHEST f32
    # reference over 5 chained blocks: a few-percent relative tolerance.
    assert rel_err < 5e-2, f"mismatch vs reference: rel err = {rel_err}"

    print("KERNEL_OK")
</pallas_src>

<mosaic_0001>
module attributes {stable_mosaic.version = 11 : i64} {
  func.func @_resblock_proj_kernel(%arg0: i32, %arg1: memref<1x128x8xbf16, #tpu.memory_space<vmem>>, %arg2: memref<3x8x128xbf16, #tpu.memory_space<vmem>>, %arg3: memref<1x128xf32, #tpu.memory_space<vmem>>, %arg4: memref<3x128x128xbf16, #tpu.memory_space<vmem>>, %arg5: memref<1x128xf32, #tpu.memory_space<vmem>>, %arg6: memref<8x128xbf16, #tpu.memory_space<vmem>>, %arg7: memref<1x128xf32, #tpu.memory_space<vmem>>, %arg8: memref<1x128x128xbf16, #tpu.memory_space<vmem>>) attributes {dimension_semantics = [#tpu.dimension_semantics<parallel>], iteration_bounds = array<i64: 2>, scalar_prefetch = 0 : i64, scratch_operands = 0 : i64, tpu.core_type = #tpu.core_type<tc>, window_params = [{transform_indices = @transform_0, window_bounds = array<i64: 1, 128, 8>}, {pipeline_mode = #tpu.pipeline_mode<synchronous>, transform_indices = @transform_1, window_bounds = array<i64: 3, 8, 128>}, {pipeline_mode = #tpu.pipeline_mode<synchronous>, transform_indices = @transform_2, window_bounds = array<i64: 1, 128>}, {pipeline_mode = #tpu.pipeline_mode<synchronous>, transform_indices = @transform_3, window_bounds = array<i64: 3, 128, 128>}, {pipeline_mode = #tpu.pipeline_mode<synchronous>, transform_indices = @transform_4, window_bounds = array<i64: 1, 128>}, {pipeline_mode = #tpu.pipeline_mode<synchronous>, transform_indices = @transform_5, window_bounds = array<i64: 8, 128>}, {pipeline_mode = #tpu.pipeline_mode<synchronous>, transform_indices = @transform_6, window_bounds = array<i64: 1, 128>}, {transform_indices = @transform_7, window_bounds = array<i64: 1, 128, 128>}]} {
    %c0 = arith.constant 0 : index
    %c0_0 = arith.constant 0 : index
    %c0_1 = arith.constant 0 : index
    %0 = vector.load %arg1[%c0, %c0_0, %c0_1] : memref<1x128x8xbf16, #tpu.memory_space<vmem>>, vector<1x128x8xbf16>
    %1 = vector.shape_cast %0 : vector<1x128x8xbf16> to vector<128x8xbf16>
    %c0_2 = arith.constant 0 : index
    %c0_3 = arith.constant 0 : index
    %c0_4 = arith.constant 0 : index
    %2 = vector.load %arg2[%c0_2, %c0_3, %c0_4] : memref<3x8x128xbf16, #tpu.memory_space<vmem>>, vector<1x8x128xbf16>
    %3 = vector.shape_cast %2 : vector<1x8x128xbf16> to vector<8x128xbf16>
    %cst = arith.constant dense<0.000000e+00> : vector<128x128xf32>
    %4 = tpu.matmul %1, %3, %cst {dimension_numbers = #tpu.dot_dimension_numbers<[1], [0], [0], [1], [0, 0, 1, 1], [], []>} : vector<128x8xbf16>, vector<8x128xbf16>, vector<128x128xf32> -> vector<128x128xf32>
    %c1 = arith.constant 1 : index
    %c0_5 = arith.constant 0 : index
    %c0_6 = arith.constant 0 : index
    %5 = vector.load %arg2[%c1, %c0_5, %c0_6] : memref<3x8x128xbf16, #tpu.memory_space<vmem>>, vector<1x8x128xbf16>
    %6 = vector.shape_cast %5 : vector<1x8x128xbf16> to vector<8x128xbf16>
    %cst_7 = arith.constant dense<0.000000e+00> : vector<128x128xf32>
    %7 = tpu.matmul %1, %6, %cst_7 {dimension_numbers = #tpu.dot_dimension_numbers<[1], [0], [0], [1], [0, 0, 1, 1], [], []>} : vector<128x8xbf16>, vector<8x128xbf16>, vector<128x128xf32> -> vector<128x128xf32>
    %c2 = arith.constant 2 : index
    %c0_8 = arith.constant 0 : index
    %c0_9 = arith.constant 0 : index
    %8 = vector.load %arg2[%c2, %c0_8, %c0_9] : memref<3x8x128xbf16, #tpu.memory_space<vmem>>, vector<1x8x128xbf16>
    %9 = vector.shape_cast %8 : vector<1x8x128xbf16> to vector<8x128xbf16>
    %cst_10 = arith.constant dense<0.000000e+00> : vector<128x128xf32>
    %10 = tpu.matmul %1, %9, %cst_10 {dimension_numbers = #tpu.dot_dimension_numbers<[1], [0], [0], [1], [0, 0, 1, 1], [], []>} : vector<128x8xbf16>, vector<8x128xbf16>, vector<128x128xf32> -> vector<128x128xf32>
    %11 = tpu.iota {dimensions = array<i32: 0>} : vector<128x128xi32>
    %c0_i32 = arith.constant 0 : i32
    %12 = vector.broadcast %c0_i32 : i32 to vector<128x128xi32>
    %13 = arith.cmpi sgt, %11, %12 : vector<128x128xi32>
    %c1_i32 = arith.constant 1 : i32
    %14 = tpu.dynamic_rotate %4 by %c1_i32 dim 0 : vector<128x128xf32>, i32 -> vector<128x128xf32>
    %cst_11 = arith.constant 0.000000e+00 : f32
    %15 = vector.broadcast %cst_11 : f32 to vector<128x128xf32>
    %16 = arith.select %13, %14, %15 : vector<128x128xi1>, vector<128x128xf32>
    %c127_i32 = arith.constant 127 : i32
    %17 = vector.broadcast %c127_i32 : i32 to vector<128x128xi32>
    %18 = arith.cmpi slt, %11, %17 : vector<128x128xi32>
    %c127_i32_12 = arith.constant 127 : i32
    %19 = tpu.dynamic_rotate %10 by %c127_i32_12 dim 0 : vector<128x128xf32>, i32 -> vector<128x128xf32>
    %cst_13 = arith.constant 0.000000e+00 : f32
    %20 = vector.broadcast %cst_13 : f32 to vector<128x128xf32>
    %21 = arith.select %18, %19, %20 : vector<128x128xi1>, vector<128x128xf32>
    %22 = arith.addf %7, %16 : vector<128x128xf32>
    %23 = arith.addf %22, %21 : vector<128x128xf32>
    %c0_14 = arith.constant 0 : index
    %c0_15 = arith.constant 0 : index
    %24 = vector.load %arg3[%c0_14, %c0_15] : memref<1x128xf32, #tpu.memory_space<vmem>>, vector<1x128xf32>
    %25 = vector.broadcast %24 : vector<1x128xf32> to vector<128x128xf32>
    %26 = arith.addf %23, %25 : vector<128x128xf32>
    %cst_16 = arith.constant 0.000000e+00 : f32
    %27 = vector.broadcast %cst_16 : f32 to vector<128x128xf32>
    %28 = arith.maximumf %26, %27 : vector<128x128xf32>
    %29 = arith.truncf %28 : vector<128x128xf32> to vector<128x128xbf16>
    %c0_17 = arith.constant 0 : index
    %c0_18 = arith.constant 0 : index
    %c0_19 = arith.constant 0 : index
    %30 = vector.load %arg4[%c0_17, %c0_18, %c0_19] : memref<3x128x128xbf16, #tpu.memory_space<vmem>>, vector<1x128x128xbf16>
    %31 = vector.shape_cast %30 : vector<1x128x128xbf16> to vector<128x128xbf16>
    %cst_20 = arith.constant dense<0.000000e+00> : vector<128x128xf32>
    %32 = tpu.matmul %29, %31, %cst_20 {dimension_numbers = #tpu.dot_dimension_numbers<[1], [0], [0], [1], [0, 0, 1, 1], [], []>} : vector<128x128xbf16>, vector<128x128xbf16>, vector<128x128xf32> -> vector<128x128xf32>
    %c1_21 = arith.constant 1 : index
    %c0_22 = arith.constant 0 : index
    %c0_23 = arith.constant 0 : index
    %33 = vector.load %arg4[%c1_21, %c0_22, %c0_23] : memref<3x128x128xbf16, #tpu.memory_space<vmem>>, vector<1x128x128xbf16>
    %34 = vector.shape_cast %33 : vector<1x128x128xbf16> to vector<128x128xbf16>
    %cst_24 = arith.constant dense<0.000000e+00> : vector<128x128xf32>
    %35 = tpu.matmul %29, %34, %cst_24 {dimension_numbers = #tpu.dot_dimension_numbers<[1], [0], [0], [1], [0, 0, 1, 1], [], []>} : vector<128x128xbf16>, vector<128x128xbf16>, vector<128x128xf32> -> vector<128x128xf32>
    %c2_25 = arith.constant 2 : index
    %c0_26 = arith.constant 0 : index
    %c0_27 = arith.constant 0 : index
    %36 = vector.load %arg4[%c2_25, %c0_26, %c0_27] : memref<3x128x128xbf16, #tpu.memory_space<vmem>>, vector<1x128x128xbf16>
    %37 = vector.shape_cast %36 : vector<1x128x128xbf16> to vector<128x128xbf16>
    %cst_28 = arith.constant dense<0.000000e+00> : vector<128x128xf32>
    %38 = tpu.matmul %29, %37, %cst_28 {dimension_numbers = #tpu.dot_dimension_numbers<[1], [0], [0], [1], [0, 0, 1, 1], [], []>} : vector<128x128xbf16>, vector<128x128xbf16>, vector<128x128xf32> -> vector<128x128xf32>
    %39 = tpu.iota {dimensions = array<i32: 0>} : vector<128x128xi32>
    %c0_i32_29 = arith.constant 0 : i32
    %40 = vector.broadcast %c0_i32_29 : i32 to vector<128x128xi32>
    %41 = arith.cmpi sgt, %39, %40 : vector<128x128xi32>
    %c1_i32_30 = arith.constant 1 : i32
    %42 = tpu.dynamic_rotate %32 by %c1_i32_30 dim 0 : vector<128x128xf32>, i32 -> vector<128x128xf32>
    %cst_31 = arith.constant 0.000000e+00 : f32
    %43 = vector.broadcast %cst_31 : f32 to vector<128x128xf32>
    %44 = arith.select %41, %42, %43 : vector<128x128xi1>, vector<128x128xf32>
    %c127_i32_32 = arith.constant 127 : i32
    %45 = vector.broadcast %c127_i32_32 : i32 to vector<128x128xi32>
    %46 = arith.cmpi slt, %39, %45 : vector<128x128xi32>
    %c127_i32_33 = arith.constant 127 : i32
    %47 = tpu.dynamic_rotate %38 by %c127_i32_33 dim 0 : vector<128x128xf32>, i32 -> vector<128x128xf32>
    %cst_34 = arith.constant 0.000000e+00 : f32
    %48 = vector.broadcast %cst_34 : f32 to vector<128x128xf32>
    %49 = arith.select %46, %47, %48 : vector<128x128xi1>, vector<128x128xf32>
    %50 = arith.addf %35, %44 : vector<128x128xf32>
    %51 = arith.addf %50, %49 : vector<128x128xf32>
    %c0_35 = arith.constant 0 : index
    %c0_36 = arith.constant 0 : index
    %52 = vector.load %arg5[%c0_35, %c0_36] : memref<1x128xf32, #tpu.memory_space<vmem>>, vector<1x128xf32>
    %53 = vector.broadcast %52 : vector<1x128xf32> to vector<128x128xf32>
    %54 = arith.addf %51, %53 : vector<128x128xf32>
    %c0_37 = arith.constant 0 : index
    %c0_38 = arith.constant 0 : index
    %55 = vector.load %arg6[%c0_37, %c0_38] : memref<8x128xbf16, #tpu.memory_space<vmem>>, vector<8x128xbf16>
    %cst_39 = arith.constant dense<0.000000e+00> : vector<128x128xf32>
    %56 = tpu.matmul %1, %55, %cst_39 {dimension_numbers = #tpu.dot_dimension_numbers<[1], [0], [0], [1], [0, 0, 1, 1], [], []>} : vector<128x8xbf16>, vector<8x128xbf16>, vector<128x128xf32> -> vector<128x128xf32>
    %c0_40 = arith.constant 0 : index
    %c0_41 = arith.constant 0 : index
    %57 = vector.load %arg7[%c0_40, %c0_41] : memref<1x128xf32, #tpu.memory_space<vmem>>, vector<1x128xf32>
    %58 = vector.broadcast %57 : vector<1x128xf32> to vector<128x128xf32>
    %59 = arith.addf %56, %58 : vector<128x128xf32>
    %60 = arith.addf %54, %59 : vector<128x128xf32>
    %cst_42 = arith.constant 0.000000e+00 : f32
    %61 = vector.broadcast %cst_42 : f32 to vector<128x128xf32>
    %62 = arith.maximumf %60, %61 : vector<128x128xf32>
    %63 = arith.truncf %62 : vector<128x128xf32> to vector<128x128xbf16>
    %c0_43 = arith.constant 0 : index
    %c0_44 = arith.constant 0 : index
    %c0_45 = arith.constant 0 : index
    %64 = vector.load %arg8[%c0_43, %c0_44, %c0_45] : memref<1x128x128xbf16, #tpu.memory_space<vmem>>, vector<1x128x128xbf16>
    %65 = vector.shape_cast %64 : vector<1x128x128xbf16> to vector<128x128xbf16>
    %66 = vector.shape_cast %63 : vector<128x128xbf16> to vector<1x128x128xbf16>
    tpu.vector_store %arg8[%c0_43, %c0_44, %c0_45], %66 {strides = array<i32>} : memref<1x128x128xbf16, #tpu.memory_space<vmem>>, vector<1x128x128xbf16>,
    return
  }
  func.func @transform_0(%arg0: i32) -> (i32, i32, i32) {
    %c0_i32 = arith.constant 0 : i32
    %c0_i32_0 = arith.constant 0 : i32
    %c0_i32_1 = arith.constant 0 : i32
    return %arg0, %c0_i32, %c0_i32_0 : i32, i32, i32
  }
  func.func @transform_1(%arg0: i32) -> (i32, i32, i32) {
    %c0_i32 = arith.constant 0 : i32
    %c0_i32_0 = arith.constant 0 : i32
    %c0_i32_1 = arith.constant 0 : i32
    %c0_i32_2 = arith.constant 0 : i32
    return %c0_i32, %c0_i32_0, %c0_i32_1 : i32, i32, i32
  }
  func.func @transform_2(%arg0: i32) -> (i32, i32) {
    %c0_i32 = arith.constant 0 : i32
    %c0_i32_0 = arith.constant 0 : i32
    %c0_i32_1 = arith.constant 0 : i32
    return %c0_i32, %c0_i32_0 : i32, i32
  }
  func.func @transform_3(%arg0: i32) -> (i32, i32, i32) {
    %c0_i32 = arith.constant 0 : i32
    %c0_i32_0 = arith.constant 0 : i32
    %c0_i32_1 = arith.constant 0 : i32
    %c0_i32_2 = arith.constant 0 : i32
    return %c0_i32, %c0_i32_0, %c0_i32_1 : i32, i32, i32
  }
  func.func @transform_4(%arg0: i32) -> (i32, i32) {
    %c0_i32 = arith.constant 0 : i32
    %c0_i32_0 = arith.constant 0 : i32
    %c0_i32_1 = arith.constant 0 : i32
    return %c0_i32, %c0_i32_0 : i32, i32
  }
  func.func @transform_5(%arg0: i32) -> (i32, i32) {
    %c0_i32 = arith.constant 0 : i32
    %c0_i32_0 = arith.constant 0 : i32
    %c0_i32_1 = arith.constant 0 : i32
    return %c0_i32, %c0_i32_0 : i32, i32
  }
  func.func @transform_6(%arg0: i32) -> (i32, i32) {
    %c0_i32 = arith.constant 0 : i32
    %c0_i32_0 = arith.constant 0 : i32
    %c0_i32_1 = arith.constant 0 : i32
    return %c0_i32, %c0_i32_0 : i32, i32
  }
  func.func @transform_7(%arg0: i32) -> (i32, i32, i32) {
    %c0_i32 = arith.constant 0 : i32
    %c0_i32_0 = arith.constant 0 : i32
    %c0_i32_1 = arith.constant 0 : i32
    return %arg0, %c0_i32, %c0_i32_0 : i32, i32, i32
  }
}

</mosaic_0001>

<llo_original>
// kernel: tpu_custom_call.1
$region0: #{tpu_custom_call.1}
  #allocation0 [shape = 'u32[]', space=smem, size = 0x4, offset = 0x4, fixed_abs, tag = 'smem constant byte address 0x4 - core index']
  #allocation1 [shape = 'u32[144,128]{1,0:T(1,128)}', space=vmem, size = 0x12000, scoped, tag = 'internal scratch']
  %s0 = inlined_call_operand.vmem [shape: bf16[2,128,8], index: 0, kind: input, shape index: {}]
  %s1 = inlined_call_operand.vmem [shape: bf16[3,8,128], index: 1, kind: input, shape index: {}]
  %s2 = inlined_call_operand.vmem [shape: f32[1,128], index: 2, kind: input, shape index: {}]
  %s3 = inlined_call_operand.hbm [shape: bf16[3,128,128], index: 3, kind: input, shape index: {}]
  %s4 = inlined_call_operand.vmem [shape: f32[1,128], index: 4, kind: input, shape index: {}]
  %s5 = inlined_call_operand.vmem [shape: bf16[8,128], index: 5, kind: input, shape index: {}]
  %s6 = inlined_call_operand.vmem [shape: f32[1,128], index: 6, kind: input, shape index: {}]
  %s7 = inlined_call_operand.hbm [shape: bf16[2,128,128], index: 7, kind: output, shape index: {}]
  %s8 = sld [smem:[#allocation0]]
  $region65: #{tpu_custom_call.1} parent=0
    _
  %s10 = ssub.s32 1, %s8
  %s11 = scalar_select 0, %s10, %s8
  $region1: #{tpu_custom_call.1} parent=0
    #allocation2 [shape = 'u8[98304]{0}', space=vmem, size = 0x18000, scoped, tag = 'input window, operand 3, single buffered']
    #allocation3 [shape = 's32[2]{0}', space=sflag, size = 0x8, scoped, tag = 'scoped memory for tpu_custom_call.1']
    #allocation4 [shape = 's32[2]{0}', space=sflag, size = 0x8, scoped, tag = 'scoped memory for tpu_custom_call.1']
    #allocation5 [shape = 'u8[65536]{0}', space=vmem, size = 0x10000, scoped, tag = 'output window, operand 0']
    %12 = vsyncpa [#allocation3], 0
    %13 = vsyncpa [#allocation4], 0
    %s14 = scalar_lea.sflag [#allocation4], 1
    %15 = vsyncpa %s14, 0
    loop: start=0, step=1, limit=4
    $region2: #{tpu_custom_call.1} parent=1 // loop_pre_header
      _
    $region3: #{tpu_custom_call.1} parent=1 // loop_header
      %s17 = sphi 0, %s21
      %p18 = scmp.ge.s32.totalorder %s17, 4
      %s27 = sphi 0, %s29
      %s30 = sphi 0, %s27
      %s31 = sphi 0, %s30
      %s47 = sphi 0, %s31
      %s51 = sphi 0, %s51
      %s53 = sphi 0, %s51
      %s54 = sphi 0, %s53
      %s68 = sphi 0, %s54
      %s72 = sphi 0, %s72
      %s74 = sphi 0, %s72
      %s75 = sphi 0, %s74
      %s89 = sphi 0, %s75
      %s93 = sphi 0, %s93
      %s95 = sphi 0, %s93
      %s96 = sphi 0, %s95
      %s110 = sphi 0, %s96
      %s114 = sphi 0, %s114
      %s116 = sphi 0, %s114
      %s117 = sphi 0, %s116
      %s131 = sphi 0, %s117
      %s135 = sphi 0, %s135
      %s137 = sphi 0, %s135
      %s138 = sphi 0, %s137
      %s152 = sphi 0, %s138
      %s156 = sphi 0, %s156
      %s158 = sphi 0, %s156
      %s159 = sphi 0, %s158
      %s173 = sphi 0, %s159
      %s179 = sphi 0, %s181
      %s182 = sphi 0, %s179
      %s183 = sphi 0, %s182
      %s199 = sphi 0, %s183
    $region4: #{tpu_custom_call.1} parent=1 // loop_header_branch
      %20 = sbr.rel (%p18) target = $region8
    $region5: #{tpu_custom_call.1} parent=1 // loop_body
      %s22 = ssub.s32 %s17, 1
      %s23 = ssub.s32 %s17, 2
      %s24 = sadd.s32 %s17, 1
      %s25 = ssub.s32 %s17, %s24
      %p26 = scmp.eq.s32.totalorder %s25, 0
      %s28 = sadd.s32 %s27, 1
      %s29 = scalar_select %p26, %s27, %s28
      %p32 = pneg %p26
      %p33 = scmp.eq.s32.totalorder %s17, 1
      %p34 = por %p32, %p33
      %p35 = scmp.ne.s32.totalorder %s27, %s30
      %p36 = scmp.eq.s32.totalorder %s17, 0
      %p37 = por %p35, %p36
      %p38 = scmp.ne.s32.totalorder %s27, %s30
      %p39 = scmp.eq.s32.totalorder %s22, 1
      %p40 = por %p38, %p39
      %p41 = scmp.ne.s32.totalorder %s30, %s31
      %p42 = scmp.eq.s32.totalorder %s22, 0
      %p43 = por %p41, %p42
      %p44 = scmp.ne.s32.totalorder %s30, %s31
      %p45 = scmp.eq.s32.totalorder %s23, 1
      %p46 = por %p44, %p45
      %p48 = scmp.ne.s32.totalorder %s31, %s47
      %p49 = scmp.eq.s32.totalorder %s23, 0
      %p50 = por %p48, %p49
      %s52 = sadd.s32 %s51, 1
      %p55 = scmp.eq.s32.totalorder %s17, 1
      %p56 = scmp.ne.s32.totalorder %s51, %s53
      %p57 = scmp.eq.s32.totalorder %s17, 0
      %p58 = por %p56, %p57
      %p59 = scmp.ne.s32.totalorder %s51, %s53
      %p60 = scmp.eq.s32.totalorder %s22, 1
      %p61 = por %p59, %p60
      %p62 = scmp.ne.s32.totalorder %s53, %s54
      %p63 = scmp.eq.s32.totalorder %s22, 0
      %p64 = por %p62, %p63
      %p65 = scmp.ne.s32.totalorder %s53, %s54
      %p66 = scmp.eq.s32.totalorder %s23, 1
      %p67 = por %p65, %p66
      %p69 = scmp.ne.s32.totalorder %s54, %s68
      %p70 = scmp.eq.s32.totalorder %s23, 0
      %p71 = por %p69, %p70
      %s73 = sadd.s32 %s72, 1
      %p76 = scmp.eq.s32.totalorder %s17, 1
      %p77 = scmp.ne.s32.totalorder %s72, %s74
      %p78 = scmp.eq.s32.totalorder %s17, 0
      %p79 = por %p77, %p78
      %p80 = scmp.ne.s32.totalorder %s72, %s74
      %p81 = scmp.eq.s32.totalorder %s22, 1
      %p82 = por %p80, %p81
      %p83 = scmp.ne.s32.totalorder %s74, %s75
      %p84 = scmp.eq.s32.totalorder %s22, 0
      %p85 = por %p83, %p84
      %p86 = scmp.ne.s32.totalorder %s74, %s75
      %p87 = scmp.eq.s32.totalorder %s23, 1
      %p88 = por %p86, %p87
      %p90 = scmp.ne.s32.totalorder %s75, %s89
      %p91 = scmp.eq.s32.totalorder %s23, 0
      %p92 = por %p90, %p91
      %s94 = sadd.s32 %s93, 1
      %p97 = scmp.eq.s32.totalorder %s17, 1
      %p98 = scmp.ne.s32.totalorder %s93, %s95
      %p99 = scmp.eq.s32.totalorder %s17, 0
      %p100 = por %p98, %p99
      %p101 = scmp.ne.s32.totalorder %s93, %s95
      %p102 = scmp.eq.s32.totalorder %s22, 1
      %p103 = por %p101, %p102
      %p104 = scmp.ne.s32.totalorder %s95, %s96
      %p105 = scmp.eq.s32.totalorder %s22, 0
      %p106 = por %p104, %p105
      %p107 = scmp.ne.s32.totalorder %s95, %s96
      %p108 = scmp.eq.s32.totalorder %s23, 1
      %p109 = por %p107, %p108
      %p111 = scmp.ne.s32.totalorder %s96, %s110
      %p112 = scmp.eq.s32.totalorder %s23, 0
      %p113 = por %p111, %p112
      %s115 = sadd.s32 %s114, 1
      %p118 = scmp.eq.s32.totalorder %s17, 1
      %p119 = scmp.ne.s32.totalorder %s114, %s116
      %p120 = scmp.eq.s32.totalorder %s17, 0
      %p121 = por %p119, %p120
      %p122 = scmp.ne.s32.totalorder %s114, %s116
      %p123 = scmp.eq.s32.totalorder %s22, 1
      %p124 = por %p122, %p123
      %p125 = scmp.ne.s32.totalorder %s116, %s117
      %p126 = scmp.eq.s32.totalorder %s22, 0
      %p127 = por %p125, %p126
      %p128 = scmp.ne.s32.totalorder %s116, %s117
      %p129 = scmp.eq.s32.totalorder %s23, 1
      %p130 = por %p128, %p129
      %p132 = scmp.ne.s32.totalorder %s117, %s131
      %p133 = scmp.eq.s32.totalorder %s23, 0
      %p134 = por %p132, %p133
      %s136 = sadd.s32 %s135, 1
      %p139 = scmp.eq.s32.totalorder %s17, 1
      %p140 = scmp.ne.s32.totalorder %s135, %s137
      %p141 = scmp.eq.s32.totalorder %s17, 0
      %p142 = por %p140, %p141
      %p143 = scmp.ne.s32.totalorder %s135, %s137
      %p144 = scmp.eq.s32.totalorder %s22, 1
      %p145 = por %p143, %p144
      %p146 = scmp.ne.s32.totalorder %s137, %s138
      %p147 = scmp.eq.s32.totalorder %s22, 0
      %p148 = por %p146, %p147
      %p149 = scmp.ne.s32.totalorder %s137, %s138
      %p150 = scmp.eq.s32.totalorder %s23, 1
      %p151 = por %p149, %p150
      %p153 = scmp.ne.s32.totalorder %s138, %s152
      %p154 = scmp.eq.s32.totalorder %s23, 0
      %p155 = por %p153, %p154
      %s157 = sadd.s32 %s156, 1
      %p160 = scmp.eq.s32.totalorder %s17, 1
      %p161 = scmp.ne.s32.totalorder %s156, %s158
      %p162 = scmp.eq.s32.totalorder %s17, 0
      %p163 = por %p161, %p162
      %p164 = scmp.ne.s32.totalorder %s156, %s158
      %p165 = scmp.eq.s32.totalorder %s22, 1
      %p166 = por %p164, %p165
      %p167 = scmp.ne.s32.totalorder %s158, %s159
      %p168 = scmp.eq.s32.totalorder %s22, 0
      %p169 = por %p167, %p168
      %p170 = scmp.ne.s32.totalorder %s158, %s159
      %p171 = scmp.eq.s32.totalorder %s23, 1
      %p172 = por %p170, %p171
      %p174 = scmp.ne.s32.totalorder %s159, %s173
      %p175 = scmp.eq.s32.totalorder %s23, 0
      %p176 = por %p174, %p175
      %s177 = ssub.s32 %s17, %s24
      %p178 = scmp.eq.s32.totalorder %s177, 0
      %s180 = sadd.s32 %s179, 1
      %s181 = scalar_select %p178, %s179, %s180
      %p184 = pneg %p178
      %p185 = scmp.eq.s32.totalorder %s17, 1
      %p186 = por %p184, %p185
      %p187 = scmp.ne.s32.totalorder %s179, %s182
      %p188 = scmp.eq.s32.totalorder %s17, 0
      %p189 = por %p187, %p188
      %p190 = scmp.ne.s32.totalorder %s179, %s182
      %p191 = scmp.eq.s32.totalorder %s22, 1
      %p192 = por %p190, %p191
      %p193 = scmp.ne.s32.totalorder %s182, %s183
      %p194 = scmp.eq.s32.totalorder %s22, 0
      %p195 = por %p193, %p194
      %p196 = scmp.ne.s32.totalorder %s182, %s183
      %p197 = scmp.eq.s32.totalorder %s23, 1
      %p198 = por %p196, %p197
      %p200 = scmp.ne.s32.totalorder %s183, %s199
      %p201 = scmp.eq.s32.totalorder %s23, 0
      %p202 = por %p200, %p201
      %p203 = scmp.le.s32.totalorder 1, %s17
      %p204 = scmp.lt.s32.totalorder %s17, 3
      %p205 = pnand %p203, %p204
      %p206 = pneg %p205
      // Predicated region
      $region9: #{tpu_custom_call.1} parent=5 // pred_check
        _
      $region10: #{tpu_custom_call.1} parent=5 // pred_check_branch
        %208 = sbr.rel (%p205) target = $region12
      $region11: #{tpu_custom_call.1} parent=5 // pred_region
        %s209 = ssub.s32 %s17, 1
        // Predicated region
        $region13: #{tpu_custom_call.1} parent=11 // pred_check
          %p210 = pneg %p64
        $region14: #{tpu_custom_call.1} parent=11 // pred_check_branch
          %212 = sbr.rel (%p210) target = $region16
        $region15: #{tpu_custom_call.1} parent=11 // pred_region
          _
        $region16: #{tpu_custom_call.1} parent=11 // pred_fallthru
          _
        // Predicated region
        $region17: #{tpu_custom_call.1} parent=11 // pred_check
          %p213 = pneg %p85
        $region18: #{tpu_custom_call.1} parent=11 // pred_check_branch
          %215 = sbr.rel (%p213) target = $region20
        $region19: #{tpu_custom_call.1} parent=11 // pred_region
          _
        $region20: #{tpu_custom_call.1} parent=11 // pred_fallthru
          _
        // Predicated region
        $region21: #{tpu_custom_call.1} parent=11 // pred_check
          %p216 = pneg %p106
        $region22: #{tpu_custom_call.1} parent=11 // pred_check_branch
          %218 = sbr.rel (%p216) target = $region24
        $region23: #{tpu_custom_call.1} parent=11 // pred_region
          %s220 = ssub.s32 3072, 3072
          %221 = vsyncadd [#allocation3], %s220
          %s222 = sshll.u32 [#allocation2], 4
          %s223 = int_to_ptr.vmem [resolvable:$true] %s222
          %228 = dma.hbm_to_vmem [thread:$0]  %s3, 3072, %s223, [#allocation3], 64, 64, 4
        $region24: #{tpu_custom_call.1} parent=11 // pred_fallthru
          _
        // Predicated region
        $region25: #{tpu_custom_call.1} parent=11 // pred_check
          %p229 = pneg %p127
        $region26: #{tpu_custom_call.1} parent=11 // pred_check_branch
          %231 = sbr.rel (%p229) target = $region28
        $region27: #{tpu_custom_call.1} parent=11 // pred_region
          _
        $region28: #{tpu_custom_call.1} parent=11 // pred_fallthru
          _
        // Predicated region
        $region29: #{tpu_custom_call.1} parent=11 // pred_check
          %p232 = pneg %p148
        $region30: #{tpu_custom_call.1} parent=11 // pred_check_branch
          %234 = sbr.rel (%p232) target = $region32
        $region31: #{tpu_custom_call.1} parent=11 // pred_region
          _
        $region32: #{tpu_custom_call.1} parent=11 // pred_fallthru
          _
        // Predicated region
        $region33: #{tpu_custom_call.1} parent=11 // pred_check
          %p235 = pneg %p169
        $region34: #{tpu_custom_call.1} parent=11 // pred_check_branch
          %237 = sbr.rel (%p235) target = $region36
        $region35: #{tpu_custom_call.1} parent=11 // pred_region
          _
        $region36: #{tpu_custom_call.1} parent=11 // pred_fallthru
          _
      $region12: #{tpu_custom_call.1} parent=5 // pred_fallthru
        _
      %p238 = scmp.lt.s32.totalorder %s17, 2
      // Predicated region
      $region37: #{tpu_custom_call.1} parent=5 // pred_check
        %p239 = pneg %p238
      $region38: #{tpu_custom_call.1} parent=5 // pred_check_branch
        %241 = sbr.rel (%p239) target = $region40
      $region39: #{tpu_custom_call.1} parent=5 // pred_region
        // Predicated region
        $region41: #{tpu_custom_call.1} parent=39 // pred_check
          %p242 = pneg %p37
        $region42: #{tpu_custom_call.1} parent=39 // pred_check_branch
          %244 = sbr.rel (%p242) target = $region44
        $region43: #{tpu_custom_call.1} parent=39 // pred_region
          %p245 = scmp.lt.s32.totalorder %s17, 1
          %s246 = scalar_select %p245, %s17, 1
          %s247 = smul.addr %s246, 16
          %s248 = smul.addr %s247, 4
          %s249 = scalar_lea.vmem %s0, %s248
        $region44: #{tpu_custom_call.1} parent=39 // pred_fallthru
          _
      $region40: #{tpu_custom_call.1} parent=5 // pred_fallthru
        _
      %p250 = scmp.le.s32.totalorder 1, %s17
      %p251 = scmp.lt.s32.totalorder %s17, 3
      %p252 = pnand %p250, %p251
      %p253 = pneg %p252
      // Predicated region
      $region45: #{tpu_custom_call.1} parent=5 // pred_check
        _
      $region46: #{tpu_custom_call.1} parent=5 // pred_check_branch
        %255 = sbr.rel (%p252) target = $region48
      $region47: #{tpu_custom_call.1} parent=5 // pred_region
        %s256 = ssub.s32 %s17, 1
        // Predicated region
        $region49: #{tpu_custom_call.1} parent=47 // pred_check
          %p257 = pneg %p106
        $region50: #{tpu_custom_call.1} parent=47 // pred_check_branch
          %259 = sbr.rel (%p257) target = $region52
        $region51: #{tpu_custom_call.1} parent=47 // pred_region
          %260 = dma.done [#allocation3], 3072
        $region52: #{tpu_custom_call.1} parent=47 // pred_fallthru
          _
        %p261 = scmp.lt.s32.totalorder %s22, 1
        %s262 = scalar_select %p261, %s22, 1
        %s263 = smul.addr %s262, 16
        %s264 = smul.addr %s263, 4
        %s265 = scalar_lea.vmem %s0, %s264
        %p266 = pneg %p43
        %p267 = pneg %p40
        %p268 = pneg %p64
        %p269 = pneg %p61
        %p270 = pneg %p85
        %p271 = pneg %p82
        %p272 = pneg %p106
        %p273 = pneg %p103
        %p274 = pneg %p127
        %p275 = pneg %p124
        %p276 = pneg %p148
        %p277 = pneg %p145
        %p278 = pneg %p169
        %p279 = pneg %p166
        %p280 = pneg %p195
        %p281 = pneg %p192
        %s282 = sand.u32 %s182, 1
        %s283 = scalar_lea.sflag [#allocation4], %s282
        %s284 = sand.u32 %s182, 1
        %s285 = smul.addr %s284, 64
        %s286 = scalar_lea.vmem [#allocation5], %s285
        %p287 = scmp.lt.s32.totalorder %s22, 1
        %s288 = scalar_select %p287, %s22, 1
        %s289 = smul.addr %s288, 16
        %s290 = smul.addr %s289, 4
        %s291 = scalar_lea.vmem %s0, %s290
        %v293 = vld [vmem:[%s291] sm:$0xf]
        %v294 = vld [vmem:[%s291 + $0x4] sm:$0xf]
        %v295 = vld [vmem:[%s291 + $0x8] sm:$0xf]
        %v296 = vld [vmem:[%s291 + $0xc] sm:$0xf]
        %v297 = vld [vmem:[%s291 + $0x10] sm:$0xf]
        %v298 = vld [vmem:[%s291 + $0x14] sm:$0xf]
        %v299 = vld [vmem:[%s291 + $0x18] sm:$0xf]
        %v300 = vld [vmem:[%s291 + $0x1c] sm:$0xf]
        %v301 = vld [vmem:[%s291 + $0x20] sm:$0xf]
        %v302 = vld [vmem:[%s291 + $0x24] sm:$0xf]
        %v303 = vld [vmem:[%s291 + $0x28] sm:$0xf]
        %v304 = vld [vmem:[%s291 + $0x2c] sm:$0xf]
        %v305 = vld [vmem:[%s291 + $0x30] sm:$0xf]
        %v306 = vld [vmem:[%s291 + $0x34] sm:$0xf]
        %v307 = vld [vmem:[%s291 + $0x38] sm:$0xf]
        %v308 = vld [vmem:[%s291 + $0x3c] sm:$0xf]
        %v309 = vld [vmem:[%s1] sm:$0xf]
        %v326 = vunpack.c.l.b16 %v293
        %v327 = vunpack.c.l.b16 %v294
        %v328 = vunpack.c.l.b16 %v295
        %v329 = vunpack.c.l.b16 %v296
        %v330 = vunpack.c.l.b16 %v297
        %v331 = vunpack.c.l.b16 %v298
        %v332 = vunpack.c.l.b16 %v299
        %v333 = vunpack.c.l.b16 %v300
        %v334 = vunpack.c.l.b16 %v301
        %v335 = vunpack.c.l.b16 %v302
        %v336 = vunpack.c.l.b16 %v303
        %v337 = vunpack.c.l.b16 %v304
        %v338 = vunpack.c.l.b16 %v305
        %v339 = vunpack.c.l.b16 %v306
        %v340 = vunpack.c.l.b16 %v307
        %v341 = vunpack.c.l.b16 %v308
        %v342 = vpack.c.b16 %v327, %v326
        %v343 = vpack.c.b16 %v329, %v328
        %v344 = vpack.c.b16 %v331, %v330
        %v345 = vpack.c.b16 %v333, %v332
        %v346 = vpack.c.b16 %v335, %v334
        %v347 = vpack.c.b16 %v337, %v336
        %v348 = vpack.c.b16 %v339, %v338
        %v349 = vpack.c.b16 %v341, %v340
        %vm350 = vcmask 64512
        %v352 = vsel %vm350, %v342, 0
        %v355 = vsel %vm350, %v343, 0
        %v358 = vsel %vm350, %v344, 0
        %v361 = vsel %vm350, %v345, 0
        %v364 = vsel %vm350, %v346, 0
        %v367 = vsel %vm350, %v347, 0
        %v370 = vsel %vm350, %v348, 0
        %v373 = vsel %vm350, %v349, 0
        %vm375 = vcmask 1043456
        %v377 = vsel %vm375, %v309, 0
        %379 = vmatprep.subr.bf16.mxu0 0
        %380 = vmatpush1.bf16.msra.mxu0 0
        %381 = vmatprep.subr.bf16.mxu0 0
        %382 = vmatpush1.bf16.msra.mxu0 0
        %383 = vmatprep.subr.bf16.mxu0 0
        %384 = vmatpush1.bf16.msra.mxu0 0
        %385 = vmatprep.subr.bf16.mxu0 0
        %386 = vmatpush1.bf16.msra.mxu0 0
        %387 = vmatprep.subr.bf16.mxu0 0
        %388 = vmatpush1.bf16.msra.mxu0 0
        %389 = vmatprep.subr.bf16.mxu0 0
        %390 = vmatpush1.bf16.msra.mxu0 0
        %391 = vmatprep.subr.bf16.mxu0 0
        %392 = vmatpush1.bf16.msra.mxu0 0
        %393 = vmatprep.subr.bf16.mxu0 0
        %394 = vmatpush1.bf16.msra.mxu0 %v377
        %395 = vmatprep.subr.bf16.mxu0 0
        %396 = vmatpush2.bf16.msra.mxu0 0
        %397 = vmatprep.subr.bf16.mxu0 0
        %398 = vmatpush2.bf16.msra.mxu0 0
        %399 = vmatprep.subr.bf16.mxu0 0
        %400 = vmatpush2.bf16.msra.mxu0 0
        %401 = vmatprep.subr.bf16.mxu0 0
        %402 = vmatpush2.bf16.msra.mxu0 0
        %403 = vmatprep.subr.bf16.mxu0 0
        %404 = vmatpush2.bf16.msra.mxu0 0
        %405 = vmatprep.subr.bf16.mxu0 0
        %406 = vmatpush2.bf16.msra.mxu0 0
        %407 = vmatprep.subr.bf16.mxu0 0
        %408 = vmatpush2.bf16.msra.mxu0 0
        %409 = vmatprep.subr.bf16.mxu0 0
        %410 = vmatpush2.bf16.msra.mxu0 0
        %411 = vmatprep.mubr.bf16.mxu0 0
        %412 = vmatmul.mubr.bf16.gmra.mxu0 %v352
        %v413 = vpop.f32.mrf.mxu0
        %v414 = vadd.f32 0.0, %v413
        %v415 = vpop.f32.mrf.mxu0
        %v416 = vpop.f32.mrf.mxu0
        %v417 = vadd.f32 0.0, %v416
        %v418 = vpop.f32.mrf.mxu0
        %419 = vmatprep.mubr.bf16.mxu0 0
        %420 = vmatmul.mubr.bf16.gmra.mxu0 %v355
        %v421 = vpop.f32.mrf.mxu0
        %v422 = vadd.f32 0.0, %v421
        %v423 = vpop.f32.mrf.mxu0
        %v424 = vpop.f32.mrf.mxu0
        %v425 = vadd.f32 0.0, %v424
        %v426 = vpop.f32.mrf.mxu0
        %427 = vmatprep.mubr.bf16.mxu0 0
        %428 = vmatmul.mubr.bf16.gmra.mxu0 %v358
        %v429 = vpop.f32.mrf.mxu0
        %v430 = vadd.f32 0.0, %v429
        %v431 = vpop.f32.mrf.mxu0
        %v432 = vpop.f32.mrf.mxu0
        %v433 = vadd.f32 0.0, %v432
        %v434 = vpop.f32.mrf.mxu0
        %435 = vmatprep.mubr.bf16.mxu0 0
        %436 = vmatmul.mubr.bf16.gmra.mxu0 %v361
        %v437 = vpop.f32.mrf.mxu0
        %v438 = vadd.f32 0.0, %v437
        %v439 = vpop.f32.mrf.mxu0
        %v440 = vpop.f32.mrf.mxu0
        %v441 = vadd.f32 0.0, %v440
        %v442 = vpop.f32.mrf.mxu0
        %443 = vmatprep.mubr.bf16.mxu0 0
        %444 = vmatmul.mubr.bf16.gmra.mxu0 %v364
        %v445 = vpop.f32.mrf.mxu0
        %v446 = vadd.f32 0.0, %v445
        %v447 = vpop.f32.mrf.mxu0
        %v448 = vpop.f32.mrf.mxu0
        %v449 = vadd.f32 0.0, %v448
        %v450 = vpop.f32.mrf.mxu0
        %451 = vmatprep.mubr.bf16.mxu0 0
        %452 = vmatmul.mubr.bf16.gmra.mxu0 %v367
        %v453 = vpop.f32.mrf.mxu0
        %v454 = vadd.f32 0.0, %v453
        %v455 = vpop.f32.mrf.mxu0
        %v456 = vpop.f32.mrf.mxu0
        %v457 = vadd.f32 0.0, %v456
        %v458 = vpop.f32.mrf.mxu0
        %459 = vmatprep.mubr.bf16.mxu0 0
        %460 = vmatmul.mubr.bf16.gmra.mxu0 %v370
        %v461 = vpop.f32.mrf.mxu0
        %v462 = vadd.f32 0.0, %v461
        %v463 = vpop.f32.mrf.mxu0
        %v464 = vpop.f32.mrf.mxu0
        %v465 = vadd.f32 0.0, %v464
        %v466 = vpop.f32.mrf.mxu0
        %467 = vmatprep.mubr.bf16.mxu0 0
        %468 = vmatmul.mubr.bf16.gmra.mxu0 %v373
        %v469 = vpop.f32.mrf.mxu0
        %v470 = vadd.f32 0.0, %v469
        %v471 = vpop.f32.mrf.mxu0
        %v472 = vpop.f32.mrf.mxu0
        %v473 = vadd.f32 0.0, %v472
        %v474 = vpop.f32.mrf.mxu0
        %475 = vdwg.mxu0
        %s476 = scalar_lea.vmem %s1, 4
        %v477 = vld [vmem:[%s476] sm:$0xf]
        %s478 = scalar_lea.vmem %s1, 8
        %v479 = vld [vmem:[%s478] sm:$0xf]
        %v481 = vsel %vm375, %v479, 0
        %483 = vmatprep.subr.bf16.mxu0 0
        %484 = vmatpush1.bf16.msra.mxu0 0
        %485 = vmatprep.subr.bf16.mxu0 0
        %486 = vmatpush1.bf16.msra.mxu0 0
        %487 = vmatprep.subr.bf16.mxu0 0
        %488 = vmatpush1.bf16.msra.mxu0 0
        %489 = vmatprep.subr.bf16.mxu0 0
        %490 = vmatpush1.bf16.msra.mxu0 0
        %491 = vmatprep.subr.bf16.mxu0 0
        %492 = vmatpush1.bf16.msra.mxu0 0
        %493 = vmatprep.subr.bf16.mxu0 0
        %494 = vmatpush1.bf16.msra.mxu0 0
        %495 = vmatprep.subr.bf16.mxu0 0
        %496 = vmatpush1.bf16.msra.mxu0 0
        %497 = vmatprep.subr.bf16.mxu0 0
        %498 = vmatpush1.bf16.msra.mxu0 %v481
        %499 = vmatprep.subr.bf16.mxu0 0
        %500 = vmatpush2.bf16.msra.mxu0 0
        %501 = vmatprep.subr.bf16.mxu0 0
        %502 = vmatpush2.bf16.msra.mxu0 0
        %503 = vmatprep.subr.bf16.mxu0 0
        %504 = vmatpush2.bf16.msra.mxu0 0
        %505 = vmatprep.subr.bf16.mxu0 0
        %506 = vmatpush2.bf16.msra.mxu0 0
        %507 = vmatprep.subr.bf16.mxu0 0
        %508 = vmatpush2.bf16.msra.mxu0 0
        %509 = vmatprep.subr.bf16.mxu0 0
        %510 = vmatpush2.bf16.msra.mxu0 0
        %511 = vmatprep.subr.bf16.mxu0 0
        %512 = vmatpush2.bf16.msra.mxu0 0
        %513 = vmatprep.subr.bf16.mxu0 0
        %514 = vmatpush2.bf16.msra.mxu0 0
        %515 = vmatprep.mubr.bf16.mxu0 0
        %516 = vmatmul.mubr.bf16.gmra.mxu0 %v352
        %v517 = vpop.f32.mrf.mxu0
        %v518 = vadd.f32 0.0, %v517
        %v519 = vpop.f32.mrf.mxu0
        %v520 = vpop.f32.mrf.mxu0
        %v521 = vadd.f32 0.0, %v520
        %v522 = vpop.f32.mrf.mxu0
        %523 = vmatprep.mubr.bf16.mxu0 0
        %524 = vmatmul.mubr.bf16.gmra.mxu0 %v355
        %v525 = vpop.f32.mrf.mxu0
        %v526 = vadd.f32 0.0, %v525
        %v527 = vpop.f32.mrf.mxu0
        %v528 = vpop.f32.mrf.mxu0
        %v529 = vadd.f32 0.0, %v528
        %v530 = vpop.f32.mrf.mxu0
        %531 = vmatprep.mubr.bf16.mxu0 0
        %532 = vmatmul.mubr.bf16.gmra.mxu0 %v358
        %v533 = vpop.f32.mrf.mxu0
        %v534 = vadd.f32 0.0, %v533
        %v535 = vpop.f32.mrf.mxu0
        %v536 = vpop.f32.mrf.mxu0
        %v537 = vadd.f32 0.0, %v536
        %v538 = vpop.f32.mrf.mxu0
        %539 = vmatprep.mubr.bf16.mxu0 0
        %540 = vmatmul.mubr.bf16.gmra.mxu0 %v361
        %v541 = vpop.f32.mrf.mxu0
        %v542 = vadd.f32 0.0, %v541
        %v543 = vpop.f32.mrf.mxu0
        %v544 = vpop.f32.mrf.mxu0
        %v545 = vadd.f32 0.0, %v544
        %v546 = vpop.f32.mrf.mxu0
        %547 = vmatprep.mubr.bf16.mxu0 0
        %548 = vmatmul.mubr.bf16.gmra.mxu0 %v364
        %v549 = vpop.f32.mrf.mxu0
        %v550 = vadd.f32 0.0, %v549
        %v551 = vpop.f32.mrf.mxu0
        %v552 = vpop.f32.mrf.mxu0
        %v553 = vadd.f32 0.0, %v552
        %v554 = vpop.f32.mrf.mxu0
        %555 = vmatprep.mubr.bf16.mxu0 0
        %556 = vmatmul.mubr.bf16.gmra.mxu0 %v367
        %v557 = vpop.f32.mrf.mxu0
        %v558 = vadd.f32 0.0, %v557
        %v559 = vpop.f32.mrf.mxu0
        %v560 = vpop.f32.mrf.mxu0
        %v561 = vadd.f32 0.0, %v560
        %v562 = vpop.f32.mrf.mxu0
        %563 = vmatprep.mubr.bf16.mxu0 0
        %564 = vmatmul.mubr.bf16.gmra.mxu0 %v370
        %v565 = vpop.f32.mrf.mxu0
        %v566 = vadd.f32 0.0, %v565
        %v567 = vpop.f32.mrf.mxu0
        %v568 = vpop.f32.mrf.mxu0
        %v569 = vadd.f32 0.0, %v568
        %v570 = vpop.f32.mrf.mxu0
        %571 = vmatprep.mubr.bf16.mxu0 0
        %572 = vmatmul.mubr.bf16.gmra.mxu0 %v373
        %v573 = vpop.f32.mrf.mxu0
        %v574 = vadd.f32 0.0, %v573
        %v575 = vpop.f32.mrf.mxu0
        %v576 = vpop.f32.mrf.mxu0
        %v577 = vadd.f32 0.0, %v576
        %v578 = vpop.f32.mrf.mxu0
        %579 = vdwg.mxu0
        %v580 = vlaneseq
        %v581 = vshrl.u32 %v580, 7
        %v582 = vadd.s32 %v581, 8
        %v583 = vadd.s32 %v581, 16
        %v584 = vadd.s32 %v581, 24
        %v585 = vadd.s32 %v581, 32
        %v586 = vadd.s32 %v581, 40
        %v587 = vadd.s32 %v581, 48
        %v588 = vadd.s32 %v581, 56
        %v589 = vadd.s32 %v581, 64
        %v590 = vadd.s32 %v581, 72
        %v591 = vadd.s32 %v581, 80
        %v592 = vadd.s32 %v581, 88
        %v593 = vadd.s32 %v581, 96
        %v594 = vadd.s32 %v581, 104
        %v595 = vadd.s32 %v581, 112
        %v596 = vadd.s32 %v581, 120
        %vm597 = vcmp.gt.s32.totalorder %v581, 0
        %vm598 = vcmp.gt.s32.totalorder %v582, 0
        %vm599 = vcmp.gt.s32.totalorder %v583, 0
        %vm600 = vcmp.gt.s32.totalorder %v584, 0
        %vm601 = vcmp.gt.s32.totalorder %v585, 0
        %vm602 = vcmp.gt.s32.totalorder %v586, 0
        %vm603 = vcmp.gt.s32.totalorder %v587, 0
        %vm604 = vcmp.gt.s32.totalorder %v588, 0
        %vm605 = vcmp.gt.s32.totalorder %v589, 0
        %vm606 = vcmp.gt.s32.totalorder %v590, 0
        %vm607 = vcmp.gt.s32.totalorder %v591, 0
        %vm608 = vcmp.gt.s32.totalorder %v592, 0
        %vm609 = vcmp.gt.s32.totalorder %v593, 0
        %vm610 = vcmp.gt.s32.totalorder %v594, 0
        %vm611 = vcmp.gt.s32.totalorder %v595, 0
        %vm612 = vcmp.gt.s32.totalorder %v596, 0
        %v613 = vrot.slane %v414, 7
        %v614 = vrot.slane %v417, 7
        %v615 = vrot.slane %v422, 7
        %v616 = vrot.slane %v425, 7
        %v617 = vrot.slane %v430, 7
        %v618 = vrot.slane %v433, 7
        %v619 = vrot.slane %v438, 7
        %v620 = vrot.slane %v441, 7
        %v621 = vrot.slane %v446, 7
        %v622 = vrot.slane %v449, 7
        %v623 = vrot.slane %v454, 7
        %v624 = vrot.slane %v457, 7
        %v625 = vrot.slane %v462, 7
        %v626 = vrot.slane %v465, 7
        %v627 = vrot.slane %v470, 7
        %v628 = vrot.slane %v473, 7
        %vm629 = vcmp.lt.s32.totalorder %v581, 1
        %v630 = vsel %vm629, %v627, %v628
        %v631 = vsel %vm629, %v626, %v627
        %v632 = vsel %vm629, %v625, %v626
        %v633 = vsel %vm629, %v624, %v625
        %v634 = vsel %vm629, %v623, %v624
        %v635 = vsel %vm629, %v622, %v623
        %v636 = vsel %vm629, %v621, %v622
        %v637 = vsel %vm629, %v620, %v621
        %v638 = vsel %vm629, %v619, %v620
        %v639 = vsel %vm629, %v618, %v619
        %v640 = vsel %vm629, %v617, %v618
        %v641 = vsel %vm629, %v616, %v617
        %v642 = vsel %vm629, %v615, %v616
        %v643 = vsel %vm629, %v614, %v615
        %v644 = vsel %vm629, %v613, %v614
        %v645 = vsel %vm629, %v628, %v613
        %v646 = vsel %vm597, %v645, 0.0
        %v647 = vsel %vm598, %v644, 0.0
        %v648 = vsel %vm599, %v643, 0.0
        %v649 = vsel %vm600, %v642, 0.0
        %v650 = vsel %vm601, %v641, 0.0
        %v651 = vsel %vm602, %v640, 0.0
        %v652 = vsel %vm603, %v639, 0.0
        %v653 = vsel %vm604, %v638, 0.0
        %v654 = vsel %vm605, %v637, 0.0
        %v655 = vsel %vm606, %v636, 0.0
        %v656 = vsel %vm607, %v635, 0.0
        %v657 = vsel %vm608, %v634, 0.0
        %v658 = vsel %vm609, %v633, 0.0
        %v659 = vsel %vm610, %v632, 0.0
        %v660 = vsel %vm611, %v631, 0.0
        %v661 = vsel %vm612, %v630, 0.0
        %vm662 = vcmp.lt.s32.totalorder %v581, 127
        %vm663 = vcmp.lt.s32.totalorder %v582, 127
        %vm664 = vcmp.lt.s32.totalorder %v583, 127
        %vm665 = vcmp.lt.s32.totalorder %v584, 127
        %vm666 = vcmp.lt.s32.totalorder %v585, 127
        %vm667 = vcmp.lt.s32.totalorder %v586, 127
        %vm668 = vcmp.lt.s32.totalorder %v587, 127
        %vm669 = vcmp.lt.s32.totalorder %v588, 127
        %vm670 = vcmp.lt.s32.totalorder %v589, 127
        %vm671 = vcmp.lt.s32.totalorder %v590, 127
        %vm672 = vcmp.lt.s32.totalorder %v591, 127
        %vm673 = vcmp.lt.s32.totalorder %v592, 127
        %vm674 = vcmp.lt.s32.totalorder %v593, 127
        %vm675 = vcmp.lt.s32.totalorder %v594, 127
        %vm676 = vcmp.lt.s32.totalorder %v595, 127
        %vm677 = vcmp.lt.s32.totalorder %v596, 127
        %v678 = vrot.slane %v518, 1
        %v679 = vrot.slane %v521, 1
        %v680 = vrot.slane %v526, 1
        %v681 = vrot.slane %v529, 1
        %v682 = vrot.slane %v534, 1
        %v683 = vrot.slane %v537, 1
        %v684 = vrot.slane %v542, 1
        %v685 = vrot.slane %v545, 1
        %v686 = vrot.slane %v550, 1
        %v687 = vrot.slane %v553, 1
        %v688 = vrot.slane %v558, 1
        %v689 = vrot.slane %v561, 1
        %v690 = vrot.slane %v566, 1
        %v691 = vrot.slane %v569, 1
        %v692 = vrot.slane %v574, 1
        %v693 = vrot.slane %v577, 1
        %vm694 = vcmp.lt.s32.totalorder %v581, 7
        %v695 = vsel %vm694, %v692, %v693
        %v696 = vsel %vm694, %v691, %v692
        %v697 = vsel %vm694, %v690, %v691
        %v698 = vsel %vm694, %v689, %v690
        %v699 = vsel %vm694, %v688, %v689
        %v700 = vsel %vm694, %v687, %v688
        %v701 = vsel %vm694, %v686, %v687
        %v702 = vsel %vm694, %v685, %v686
        %v703 = vsel %vm694, %v684, %v685
        %v704 = vsel %vm694, %v683, %v684
        %v705 = vsel %vm694, %v682, %v683
        %v706 = vsel %vm694, %v681, %v682
        %v707 = vsel %vm694, %v680, %v681
        %v708 = vsel %vm694, %v679, %v680
        %v709 = vsel %vm694, %v678, %v679
        %v710 = vsel %vm694, %v693, %v678
        %v711 = vsel %vm662, %v709, 0.0
        %v712 = vsel %vm663, %v708, 0.0
        %v713 = vsel %vm664, %v707, 0.0
        %v714 = vsel %vm665, %v706, 0.0
        %v715 = vsel %vm666, %v705, 0.0
        %v716 = vsel %vm667, %v704, 0.0
        %v717 = vsel %vm668, %v703, 0.0
        %v718 = vsel %vm669, %v702, 0.0
        %v719 = vsel %vm670, %v701, 0.0
        %v720 = vsel %vm671, %v700, 0.0
        %v721 = vsel %vm672, %v699, 0.0
        %v722 = vsel %vm673, %v698, 0.0
        %v723 = vsel %vm674, %v697, 0.0
        %v724 = vsel %vm675, %v696, 0.0
        %v725 = vsel %vm676, %v695, 0.0
        %v726 = vsel %vm677, %v710, 0.0
        %v728 = vsel %vm375, %v477, 0
        %730 = vmatprep.subr.bf16.mxu0 0
        %731 = vmatpush1.bf16.msra.mxu0 0
        %732 = vmatprep.subr.bf16.mxu0 0
        %733 = vmatpush1.bf16.msra.mxu0 0
        %734 = vmatprep.subr.bf16.mxu0 0
        %735 = vmatpush1.bf16.msra.mxu0 0
        %736 = vmatprep.subr.bf16.mxu0 0
        %737 = vmatpush1.bf16.msra.mxu0 0
        %738 = vmatprep.subr.bf16.mxu0 0
        %739 = vmatpush1.bf16.msra.mxu0 0
        %740 = vmatprep.subr.bf16.mxu0 0
        %741 = vmatpush1.bf16.msra.mxu0 0
        %742 = vmatprep.subr.bf16.mxu0 0
        %743 = vmatpush1.bf16.msra.mxu0 0
        %744 = vmatprep.subr.bf16.mxu0 0
        %745 = vmatpush1.bf16.msra.mxu0 %v728
        %746 = vmatprep.subr.bf16.mxu0 0
        %747 = vmatpush2.bf16.msra.mxu0 0
        %748 = vmatprep.subr.bf16.mxu0 0
        %749 = vmatpush2.bf16.msra.mxu0 0
        %750 = vmatprep.subr.bf16.mxu0 0
        %751 = vmatpush2.bf16.msra.mxu0 0
        %752 = vmatprep.subr.bf16.mxu0 0
        %753 = vmatpush2.bf16.msra.mxu0 0
        %754 = vmatprep.subr.bf16.mxu0 0
        %755 = vmatpush2.bf16.msra.mxu0 0
        %756 = vmatprep.subr.bf16.mxu0 0
        %757 = vmatpush2.bf16.msra.mxu0 0
        %758 = vmatprep.subr.bf16.mxu0 0
        %759 = vmatpush2.bf16.msra.mxu0 0
        %760 = vmatprep.subr.bf16.mxu0 0
        %761 = vmatpush2.bf16.msra.mxu0 0
        %762 = vmatprep.mubr.bf16.mxu0 0
        %763 = vmatmul.mubr.bf16.gmra.mxu0 %v352
        %v764 = vpop.f32.mrf.mxu0
        %v765 = vadd.f32 %v646, %v764
        %v766 = vpop.f32.mrf.mxu0
        %v767 = vpop.f32.mrf.mxu0
        %v768 = vadd.f32 %v647, %v767
        %v769 = vpop.f32.mrf.mxu0
        %770 = vmatprep.mubr.bf16.mxu0 0
        %771 = vmatmul.mubr.bf16.gmra.mxu0 %v355
        %v772 = vpop.f32.mrf.mxu0
        %v773 = vadd.f32 %v648, %v772
        %v774 = vpop.f32.mrf.mxu0
        %v775 = vpop.f32.mrf.mxu0
        %v776 = vadd.f32 %v649, %v775
        %v777 = vpop.f32.mrf.mxu0
        %778 = vmatprep.mubr.bf16.mxu0 0
        %779 = vmatmul.mubr.bf16.gmra.mxu0 %v358
        %v780 = vpop.f32.mrf.mxu0
        %v781 = vadd.f32 %v650, %v780
        %v782 = vpop.f32.mrf.mxu0
        %v783 = vpop.f32.mrf.mxu0
        %v784 = vadd.f32 %v651, %v783
        %v785 = vpop.f32.mrf.mxu0
        %786 = vmatprep.mubr.bf16.mxu0 0
        %787 = vmatmul.mubr.bf16.gmra.mxu0 %v361
        %v788 = vpop.f32.mrf.mxu0
        %v789 = vadd.f32 %v652, %v788
        %v790 = vpop.f32.mrf.mxu0
        %v791 = vpop.f32.mrf.mxu0
        %v792 = vadd.f32 %v653, %v791
        %v793 = vpop.f32.mrf.mxu0
        %794 = vmatprep.mubr.bf16.mxu0 0
        %795 = vmatmul.mubr.bf16.gmra.mxu0 %v364
        %v796 = vpop.f32.mrf.mxu0
        %v797 = vadd.f32 %v654, %v796
        %v798 = vpop.f32.mrf.mxu0
        %v799 = vpop.f32.mrf.mxu0
        %v800 = vadd.f32 %v655, %v799
        %v801 = vpop.f32.mrf.mxu0
        %802 = vmatprep.mubr.bf16.mxu0 0
        %803 = vmatmul.mubr.bf16.gmra.mxu0 %v367
        %v804 = vpop.f32.mrf.mxu0
        %v805 = vadd.f32 %v656, %v804
        %v806 = vpop.f32.mrf.mxu0
        %v807 = vpop.f32.mrf.mxu0
        %v808 = vadd.f32 %v657, %v807
        %v809 = vpop.f32.mrf.mxu0
        %810 = vmatprep.mubr.bf16.mxu0 0
        %811 = vmatmul.mubr.bf16.gmra.mxu0 %v370
        %v812 = vpop.f32.mrf.mxu0
        %v813 = vadd.f32 %v658, %v812
        %v814 = vpop.f32.mrf.mxu0
        %v815 = vpop.f32.mrf.mxu0
        %v816 = vadd.f32 %v659, %v815
        %v817 = vpop.f32.mrf.mxu0
        %818 = vmatprep.mubr.bf16.mxu0 0
        %819 = vmatmul.mubr.bf16.gmra.mxu0 %v373
        %v820 = vpop.f32.mrf.mxu0
        %v821 = vadd.f32 %v660, %v820
        %v822 = vpop.f32.mrf.mxu0
        %v823 = vpop.f32.mrf.mxu0
        %v824 = vadd.f32 %v661, %v823
        %v825 = vpop.f32.mrf.mxu0
        %826 = vdwg.mxu0
        %v827 = vadd.f32 %v765, %v711
        %v828 = vadd.f32 %v768, %v712
        %v829 = vadd.f32 %v773, %v713
        %v830 = vadd.f32 %v776, %v714
        %v831 = vadd.f32 %v781, %v715
        %v832 = vadd.f32 %v784, %v716
        %v833 = vadd.f32 %v789, %v717
        %v834 = vadd.f32 %v792, %v718
        %v835 = vadd.f32 %v797, %v719
        %v836 = vadd.f32 %v800, %v720
        %v837 = vadd.f32 %v805, %v721
        %v838 = vadd.f32 %v808, %v722
        %v839 = vadd.f32 %v813, %v723
        %v840 = vadd.f32 %v816, %v724
        %v841 = vadd.f32 %v821, %v725
        %v842 = vadd.f32 %v824, %v726
        %v843 = vld [vmem:[%s2] sm:$0x1]
        %v845 = vlaneseq
        %v846 = vshrl.u32 %v845, 7
        %v847 = vsub.s32 0, %v846
        %v848 = vrot.slane %v843, %v847
        %v850 = vadd.f32 %v827, %v848
        %v851 = vadd.f32 %v828, %v848
        %v852 = vadd.f32 %v829, %v848
        %v853 = vadd.f32 %v830, %v848
        %v854 = vadd.f32 %v831, %v848
        %v855 = vadd.f32 %v832, %v848
        %v856 = vadd.f32 %v833, %v848
        %v857 = vadd.f32 %v834, %v848
        %v858 = vadd.f32 %v835, %v848
        %v859 = vadd.f32 %v836, %v848
        %v860 = vadd.f32 %v837, %v848
        %v861 = vadd.f32 %v838, %v848
        %v862 = vadd.f32 %v839, %v848
        %v863 = vadd.f32 %v840, %v848
        %v864 = vadd.f32 %v841, %v848
        %v865 = vadd.f32 %v842, %v848
        %v866 = vmax.f32 %v850, 0.0
        %v867 = vmax.f32 %v851, 0.0
        %v868 = vmax.f32 %v852, 0.0
        %v869 = vmax.f32 %v853, 0.0
        %v870 = vmax.f32 %v854, 0.0
        %v871 = vmax.f32 %v855, 0.0
        %v872 = vmax.f32 %v856, 0.0
        %v873 = vmax.f32 %v857, 0.0
        %v874 = vmax.f32 %v858, 0.0
        %v875 = vmax.f32 %v859, 0.0
        %v876 = vmax.f32 %v860, 0.0
        %v877 = vmax.f32 %v861, 0.0
        %v878 = vmax.f32 %v862, 0.0
        %v879 = vmax.f32 %v863, 0.0
        %v880 = vmax.f32 %v864, 0.0
        %v881 = vmax.f32 %v865, 0.0
        %v882 = vpack.c.bf16 %v867, %v866
        %v883 = vpack.c.bf16 %v869, %v868
        %v884 = vpack.c.bf16 %v871, %v870
        %v885 = vpack.c.bf16 %v873, %v872
        %v886 = vpack.c.bf16 %v875, %v874
        %v887 = vpack.c.bf16 %v877, %v876
        %v888 = vpack.c.bf16 %v879, %v878
        %v889 = vpack.c.bf16 %v881, %v880
        %v890 = vld [vmem:[#allocation2] sm:$0xf]
        %v891 = vld [vmem:[#allocation2 + $0x4] sm:$0xf]
        %v892 = vld [vmem:[#allocation2 + $0x8] sm:$0xf]
        %v893 = vld [vmem:[#allocation2 + $0xc] sm:$0xf]
        %v894 = vld [vmem:[#allocation2 + $0x10] sm:$0xf]
        %v895 = vld [vmem:[#allocation2 + $0x14] sm:$0xf]
        %v896 = vld [vmem:[#allocation2 + $0x18] sm:$0xf]
        %v897 = vld [vmem:[#allocation2 + $0x1c] sm:$0xf]
        %v898 = vld [vmem:[#allocation2 + $0x20] sm:$0xf]
        %v899 = vld [vmem:[#allocation2 + $0x24] sm:$0xf]
        %v900 = vld [vmem:[#allocation2 + $0x28] sm:$0xf]
        %v901 = vld [vmem:[#allocation2 + $0x2c] sm:$0xf]
        %v902 = vld [vmem:[#allocation2 + $0x30] sm:$0xf]
        %v903 = vld [vmem:[#allocation2 + $0x34] sm:$0xf]
        %v904 = vld [vmem:[#allocation2 + $0x38] sm:$0xf]
        %v905 = vld [vmem:[#allocation2 + $0x3c] sm:$0xf]
        %v922 = vunpack.c.l.b16 %v890
        %v923 = vunpack.c.l.b16 %v891
        %v924 = vunpack.c.l.b16 %v892
        %v925 = vunpack.c.l.b16 %v893
        %v926 = vunpack.c.l.b16 %v894
        %v927 = vunpack.c.l.b16 %v895
        %v928 = vunpack.c.l.b16 %v896
        %v929 = vunpack.c.l.b16 %v897
        %v930 = vunpack.c.l.b16 %v898
        %v931 = vunpack.c.l.b16 %v899
        %v932 = vunpack.c.l.b16 %v900
        %v933 = vunpack.c.l.b16 %v901
        %v934 = vunpack.c.l.b16 %v902
        %v935 = vunpack.c.l.b16 %v903
        %v936 = vunpack.c.l.b16 %v904
        %v937 = vunpack.c.l.b16 %v905
        %v938 = vpack.c.b16 %v923, %v922
        %v939 = vpack.c.b16 %v925, %v924
        %v940 = vpack.c.b16 %v927, %v926
        %v941 = vpack.c.b16 %v929, %v928
        %v942 = vpack.c.b16 %v931, %v930
        %v943 = vpack.c.b16 %v933, %v932
        %v944 = vpack.c.b16 %v935, %v934
        %v945 = vpack.c.b16 %v937, %v936
        %954 = vmatprep.subr.bf16.mxu0 0
        %955 = vmatpush1.bf16.msra.mxu0 %v945
        %956 = vmatprep.subr.bf16.mxu0 0
        %957 = vmatpush1.bf16.msra.mxu0 %v944
        %958 = vmatprep.subr.bf16.mxu0 0
        %959 = vmatpush1.bf16.msra.mxu0 %v943
        %960 = vmatprep.subr.bf16.mxu0 0
        %961 = vmatpush1.bf16.msra.mxu0 %v942
        %962 = vmatprep.subr.bf16.mxu0 0
        %963 = vmatpush1.bf16.msra.mxu0 %v941
        %964 = vmatprep.subr.bf16.mxu0 0
        %965 = vmatpush1.bf16.msra.mxu0 %v940
        %966 = vmatprep.subr.bf16.mxu0 0
        %967 = vmatpush1.bf16.msra.mxu0 %v939
        %968 = vmatprep.subr.bf16.mxu0 0
        %969 = vmatpush1.bf16.msra.mxu0 %v938
        %970 = vmatprep.subr.bf16.mxu0 0
        %971 = vmatpush2.bf16.msra.mxu0 0
        %972 = vmatprep.subr.bf16.mxu0 0
        %973 = vmatpush2.bf16.msra.mxu0 0
        %974 = vmatprep.subr.bf16.mxu0 0
        %975 = vmatpush2.bf16.msra.mxu0 0
        %976 = vmatprep.subr.bf16.mxu0 0
        %977 = vmatpush2.bf16.msra.mxu0 0
        %978 = vmatprep.subr.bf16.mxu0 0
        %979 = vmatpush2.bf16.msra.mxu0 0
        %980 = vmatprep.subr.bf16.mxu0 0
        %981 = vmatpush2.bf16.msra.mxu0 0
        %982 = vmatprep.subr.bf16.mxu0 0
        %983 = vmatpush2.bf16.msra.mxu0 0
        %984 = vmatprep.subr.bf16.mxu0 0
        %985 = vmatpush2.bf16.msra.mxu0 0
        %986 = vmatprep.mubr.bf16.mxu0 0
        %987 = vmatmul.mubr.bf16.gmra.mxu0 %v882
        %v988 = vpop.f32.mrf.mxu0
        %v989 = vadd.f32 0.0, %v988
        %v990 = vpop.f32.mrf.mxu0
        %v991 = vpop.f32.mrf.mxu0
        %v992 = vadd.f32 0.0, %v991
        %v993 = vpop.f32.mrf.mxu0
        %994 = vmatprep.mubr.bf16.mxu0 0
        %995 = vmatmul.mubr.bf16.gmra.mxu0 %v883
        %v996 = vpop.f32.mrf.mxu0
        %v997 = vadd.f32 0.0, %v996
        %v998 = vpop.f32.mrf.mxu0
        %v999 = vpop.f32.mrf.mxu0
        %v1000 = vadd.f32 0.0, %v999
        %v1001 = vpop.f32.mrf.mxu0
        %1002 = vmatprep.mubr.bf16.mxu0 0
        %1003 = vmatmul.mubr.bf16.gmra.mxu0 %v884
        %v1004 = vpop.f32.mrf.mxu0
        %v1005 = vadd.f32 0.0, %v1004
        %v1006 = vpop.f32.mrf.mxu0
        %v1007 = vpop.f32.mrf.mxu0
        %v1008 = vadd.f32 0.0, %v1007
        %v1009 = vpop.f32.mrf.mxu0
        %1010 = vmatprep.mubr.bf16.mxu0 0
        %1011 = vmatmul.mubr.bf16.gmra.mxu0 %v885
        %v1012 = vpop.f32.mrf.mxu0
        %v1013 = vadd.f32 0.0, %v1012
        %v1014 = vpop.f32.mrf.mxu0
        %v1015 = vpop.f32.mrf.mxu0
        %v1016 = vadd.f32 0.0, %v1015
        %v1017 = vpop.f32.mrf.mxu0
        %1018 = vmatprep.mubr.bf16.mxu0 0
        %1019 = vmatmul.mubr.bf16.gmra.mxu0 %v886
        %v1020 = vpop.f32.mrf.mxu0
        %v1021 = vadd.f32 0.0, %v1020
        %v1022 = vpop.f32.mrf.mxu0
        %v1023 = vpop.f32.mrf.mxu0
        %v1024 = vadd.f32 0.0, %v1023
        %v1025 = vpop.f32.mrf.mxu0
        %1026 = vmatprep.mubr.bf16.mxu0 0
        %1027 = vmatmul.mubr.bf16.gmra.mxu0 %v887
        %v1028 = vpop.f32.mrf.mxu0
        %v1029 = vadd.f32 0.0, %v1028
        %v1030 = vpop.f32.mrf.mxu0
        %v1031 = vpop.f32.mrf.mxu0
        %v1032 = vadd.f32 0.0, %v1031
        %v1033 = vpop.f32.mrf.mxu0
        %1034 = vmatprep.mubr.bf16.mxu0 0
        %1035 = vmatmul.mubr.bf16.gmra.mxu0 %v888
        %v1036 = vpop.f32.mrf.mxu0
        %v1037 = vadd.f32 0.0, %v1036
        %v1038 = vpop.f32.mrf.mxu0
        %v1039 = vpop.f32.mrf.mxu0
        %v1040 = vadd.f32 0.0, %v1039
        %v1041 = vpop.f32.mrf.mxu0
        %1042 = vmatprep.mubr.bf16.mxu0 0
        %1043 = vmatmul.mubr.bf16.gmra.mxu0 %v889
        %v1044 = vpop.f32.mrf.mxu0
        %v1045 = vadd.f32 0.0, %v1044
        %v1046 = vpop.f32.mrf.mxu0
        %v1047 = vpop.f32.mrf.mxu0
        %v1048 = vadd.f32 0.0, %v1047
        %v1049 = vpop.f32.mrf.mxu0
        %1050 = vdwg.mxu0
        %s1051 = scalar_lea.vmem [#allocation2], 64
        %v1052 = vld [vmem:[%s1051] sm:$0xf]
        %v1053 = vld [vmem:[%s1051 + $0x4] sm:$0xf]
        %v1054 = vld [vmem:[%s1051 + $0x8] sm:$0xf]
        %v1055 = vld [vmem:[%s1051 + $0xc] sm:$0xf]
        %v1056 = vld [vmem:[%s1051 + $0x10] sm:$0xf]
        %v1057 = vld [vmem:[%s1051 + $0x14] sm:$0xf]
        %v1058 = vld [vmem:[%s1051 + $0x18] sm:$0xf]
        %v1059 = vld [vmem:[%s1051 + $0x1c] sm:$0xf]
        %v1060 = vld [vmem:[%s1051 + $0x20] sm:$0xf]
        %v1061 = vld [vmem:[%s1051 + $0x24] sm:$0xf]
        %v1062 = vld [vmem:[%s1051 + $0x28] sm:$0xf]
        %v1063 = vld [vmem:[%s1051 + $0x2c] sm:$0xf]
        %v1064 = vld [vmem:[%s1051 + $0x30] sm:$0xf]
        %v1065 = vld [vmem:[%s1051 + $0x34] sm:$0xf]
        %v1066 = vld [vmem:[%s1051 + $0x38] sm:$0xf]
        %v1067 = vld [vmem:[%s1051 + $0x3c] sm:$0xf]
        %s1068 = scalar_lea.vmem [#allocation2], 128
        %v1069 = vld [vmem:[%s1068] sm:$0xf]
        %v1070 = vld [vmem:[%s1068 + $0x4] sm:$0xf]
        %v1071 = vld [vmem:[%s1068 + $0x8] sm:$0xf]
        %v1072 = vld [vmem:[%s1068 + $0xc] sm:$0xf]
        %v1073 = vld [vmem:[%s1068 + $0x10] sm:$0xf]
        %v1074 = vld [vmem:[%s1068 + $0x14] sm:$0xf]
        %v1075 = vld [vmem:[%s1068 + $0x18] sm:$0xf]
        %v1076 = vld [vmem:[%s1068 + $0x1c] sm:$0xf]
        %v1077 = vld [vmem:[%s1068 + $0x20] sm:$0xf]
        %v1078 = vld [vmem:[%s1068 + $0x24] sm:$0xf]
        %v1079 = vld [vmem:[%s1068 + $0x28] sm:$0xf]
        %v1080 = vld [vmem:[%s1068 + $0x2c] sm:$0xf]
        %v1081 = vld [vmem:[%s1068 + $0x30] sm:$0xf]
        %v1082 = vld [vmem:[%s1068 + $0x34] sm:$0xf]
        %v1083 = vld [vmem:[%s1068 + $0x38] sm:$0xf]
        %v1084 = vld [vmem:[%s1068 + $0x3c] sm:$0xf]
        %v1101 = vunpack.c.l.b16 %v1069
        %v1102 = vunpack.c.l.b16 %v1070
        %v1103 = vunpack.c.l.b16 %v1071
        %v1104 = vunpack.c.l.b16 %v1072
        %v1105 = vunpack.c.l.b16 %v1073
        %v1106 = vunpack.c.l.b16 %v1074
        %v1107 = vunpack.c.l.b16 %v1075
        %v1108 = vunpack.c.l.b16 %v1076
        %v1109 = vunpack.c.l.b16 %v1077
        %v1110 = vunpack.c.l.b16 %v1078
        %v1111 = vunpack.c.l.b16 %v1079
        %v1112 = vunpack.c.l.b16 %v1080
        %v1113 = vunpack.c.l.b16 %v1081
        %v1114 = vunpack.c.l.b16 %v1082
        %v1115 = vunpack.c.l.b16 %v1083
        %v1116 = vunpack.c.l.b16 %v1084
        %v1117 = vpack.c.b16 %v1102, %v1101
        %v1118 = vpack.c.b16 %v1104, %v1103
        %v1119 = vpack.c.b16 %v1106, %v1105
        %v1120 = vpack.c.b16 %v1108, %v1107
        %v1121 = vpack.c.b16 %v1110, %v1109
        %v1122 = vpack.c.b16 %v1112, %v1111
        %v1123 = vpack.c.b16 %v1114, %v1113
        %v1124 = vpack.c.b16 %v1116, %v1115
        %1133 = vmatprep.subr.bf16.mxu0 0
        %1134 = vmatpush1.bf16.msra.mxu0 %v1124
        %1135 = vmatprep.subr.bf16.mxu0 0
        %1136 = vmatpush1.bf16.msra.mxu0 %v1123
        %1137 = vmatprep.subr.bf16.mxu0 0
        %1138 = vmatpush1.bf16.msra.mxu0 %v1122
        %1139 = vmatprep.subr.bf16.mxu0 0
        %1140 = vmatpush1.bf16.msra.mxu0 %v1121
        %1141 = vmatprep.subr.bf16.mxu0 0
        %1142 = vmatpush1.bf16.msra.mxu0 %v1120
        %1143 = vmatprep.subr.bf16.mxu0 0
        %1144 = vmatpush1.bf16.msra.mxu0 %v1119
        %1145 = vmatprep.subr.bf16.mxu0 0
        %1146 = vmatpush1.bf16.msra.mxu0 %v1118
        %1147 = vmatprep.subr.bf16.mxu0 0
        %1148 = vmatpush1.bf16.msra.mxu0 %v1117
        %1149 = vmatprep.subr.bf16.mxu0 0
        %1150 = vmatpush2.bf16.msra.mxu0 0
        %1151 = vmatprep.subr.bf16.mxu0 0
        %1152 = vmatpush2.bf16.msra.mxu0 0
        %1153 = vmatprep.subr.bf16.mxu0 0
        %1154 = vmatpush2.bf16.msra.mxu0 0
        %1155 = vmatprep.subr.bf16.mxu0 0
        %1156 = vmatpush2.bf16.msra.mxu0 0
        %1157 = vmatprep.subr.bf16.mxu0 0
        %1158 = vmatpush2.bf16.msra.mxu0 0
        %1159 = vmatprep.subr.bf16.mxu0 0
        %1160 = vmatpush2.bf16.msra.mxu0 0
        %1161 = vmatprep.subr.bf16.mxu0 0
        %1162 = vmatpush2.bf16.msra.mxu0 0
        %1163 = vmatprep.subr.bf16.mxu0 0
        %1164 = vmatpush2.bf16.msra.mxu0 0
        %1165 = vmatprep.mubr.bf16.mxu0 0
        %1166 = vmatmul.mubr.bf16.gmra.mxu0 %v882
        %v1167 = vpop.f32.mrf.mxu0
        %v1168 = vadd.f32 0.0, %v1167
        %v1169 = vpop.f32.mrf.mxu0
        %v1170 = vpop.f32.mrf.mxu0
        %v1171 = vadd.f32 0.0, %v1170
        %v1172 = vpop.f32.mrf.mxu0
        %1173 = vmatprep.mubr.bf16.mxu0 0
        %1174 = vmatmul.mubr.bf16.gmra.mxu0 %v883
        %v1175 = vpop.f32.mrf.mxu0
        %v1176 = vadd.f32 0.0, %v1175
        %v1177 = vpop.f32.mrf.mxu0
        %v1178 = vpop.f32.mrf.mxu0
        %v1179 = vadd.f32 0.0, %v1178
        %v1180 = vpop.f32.mrf.mxu0
        %1181 = vmatprep.mubr.bf16.mxu0 0
        %1182 = vmatmul.mubr.bf16.gmra.mxu0 %v884
        %v1183 = vpop.f32.mrf.mxu0
        %v1184 = vadd.f32 0.0, %v1183
        %v1185 = vpop.f32.mrf.mxu0
        %v1186 = vpop.f32.mrf.mxu0
        %v1187 = vadd.f32 0.0, %v1186
        %v1188 = vpop.f32.mrf.mxu0
        %1189 = vmatprep.mubr.bf16.mxu0 0
        %1190 = vmatmul.mubr.bf16.gmra.mxu0 %v885
        %v1191 = vpop.f32.mrf.mxu0
        %v1192 = vadd.f32 0.0, %v1191
        %v1193 = vpop.f32.mrf.mxu0
        %v1194 = vpop.f32.mrf.mxu0
        %v1195 = vadd.f32 0.0, %v1194
        %v1196 = vpop.f32.mrf.mxu0
        %1197 = vmatprep.mubr.bf16.mxu0 0
        %1198 = vmatmul.mubr.bf16.gmra.mxu0 %v886
        %v1199 = vpop.f32.mrf.mxu0
        %v1200 = vadd.f32 0.0, %v1199
        %v1201 = vpop.f32.mrf.mxu0
        %v1202 = vpop.f32.mrf.mxu0
        %v1203 = vadd.f32 0.0, %v1202
        %v1204 = vpop.f32.mrf.mxu0
        %1205 = vmatprep.mubr.bf16.mxu0 0
        %1206 = vmatmul.mubr.bf16.gmra.mxu0 %v887
        %v1207 = vpop.f32.mrf.mxu0
        %v1208 = vadd.f32 0.0, %v1207
        %v1209 = vpop.f32.mrf.mxu0
        %v1210 = vpop.f32.mrf.mxu0
        %v1211 = vadd.f32 0.0, %v1210
        %v1212 = vpop.f32.mrf.mxu0
        %1213 = vmatprep.mubr.bf16.mxu0 0
        %1214 = vmatmul.mubr.bf16.gmra.mxu0 %v888
        %v1215 = vpop.f32.mrf.mxu0
        %v1216 = vadd.f32 0.0, %v1215
        %v1217 = vpop.f32.mrf.mxu0
        %v1218 = vpop.f32.mrf.mxu0
        %v1219 = vadd.f32 0.0, %v1218
        %v1220 = vpop.f32.mrf.mxu0
        %1221 = vmatprep.mubr.bf16.mxu0 0
        %1222 = vmatmul.mubr.bf16.gmra.mxu0 %v889
        %v1223 = vpop.f32.mrf.mxu0
        %v1224 = vadd.f32 0.0, %v1223
        %v1225 = vpop.f32.mrf.mxu0
        %v1226 = vpop.f32.mrf.mxu0
        %v1227 = vadd.f32 0.0, %v1226
        %v1228 = vpop.f32.mrf.mxu0
        %1229 = vdwg.mxu0
        %v1230 = vrot.slane %v989, 7
        %v1231 = vrot.slane %v992, 7
        %v1232 = vrot.slane %v997, 7
        %v1233 = vrot.slane %v1000, 7
        %v1234 = vrot.slane %v1005, 7
        %v1235 = vrot.slane %v1008, 7
        %v1236 = vrot.slane %v1013, 7
        %v1237 = vrot.slane %v1016, 7
        %v1238 = vrot.slane %v1021, 7
        %v1239 = vrot.slane %v1024, 7
        %v1240 = vrot.slane %v1029, 7
        %v1241 = vrot.slane %v1032, 7
        %v1242 = vrot.slane %v1037, 7
        %v1243 = vrot.slane %v1040, 7
        %v1244 = vrot.slane %v1045, 7
        %v1245 = vrot.slane %v1048, 7
        %v1246 = vsel %vm629, %v1244, %v1245
        %v1247 = vsel %vm629, %v1243, %v1244
        %v1248 = vsel %vm629, %v1242, %v1243
        %v1249 = vsel %vm629, %v1241, %v1242
        %v1250 = vsel %vm629, %v1240, %v1241
        %v1251 = vsel %vm629, %v1239, %v1240
        %v1252 = vsel %vm629, %v1238, %v1239
        %v1253 = vsel %vm629, %v1237, %v1238
        %v1254 = vsel %vm629, %v1236, %v1237
        %v1255 = vsel %vm629, %v1235, %v1236
        %v1256 = vsel %vm629, %v1234, %v1235
        %v1257 = vsel %vm629, %v1233, %v1234
        %v1258 = vsel %vm629, %v1232, %v1233
        %v1259 = vsel %vm629, %v1231, %v1232
        %v1260 = vsel %vm629, %v1230, %v1231
        %v1261 = vsel %vm629, %v1245, %v1230
        %v1262 = vsel %vm597, %v1261, 0.0
        %v1263 = vsel %vm598, %v1260, 0.0
        %v1264 = vsel %vm599, %v1259, 0.0
        %v1265 = vsel %vm600, %v1258, 0.0
        %v1266 = vsel %vm601, %v1257, 0.0
        %v1267 = vsel %vm602, %v1256, 0.0
        %v1268 = vsel %vm603, %v1255, 0.0
        %v1269 = vsel %vm604, %v1254, 0.0
        %v1270 = vsel %vm605, %v1253, 0.0
        %v1271 = vsel %vm606, %v1252, 0.0
        %v1272 = vsel %vm607, %v1251, 0.0
        %v1273 = vsel %vm608, %v1250, 0.0
        %v1274 = vsel %vm609, %v1249, 0.0
        %v1275 = vsel %vm610, %v1248, 0.0
        %v1276 = vsel %vm611, %v1247, 0.0
        %v1277 = vsel %vm612, %v1246, 0.0
        %v1278 = vrot.slane %v1168, 1
        %v1279 = vrot.slane %v1171, 1
        %v1280 = vrot.slane %v1176, 1
        %v1281 = vrot.slane %v1179, 1
        %v1282 = vrot.slane %v1184, 1
        %v1283 = vrot.slane %v1187, 1
        %v1284 = vrot.slane %v1192, 1
        %v1285 = vrot.slane %v1195, 1
        %v1286 = vrot.slane %v1200, 1
        %v1287 = vrot.slane %v1203, 1
        %v1288 = vrot.slane %v1208, 1
        %v1289 = vrot.slane %v1211, 1
        %v1290 = vrot.slane %v1216, 1
        %v1291 = vrot.slane %v1219, 1
        %v1292 = vrot.slane %v1224, 1
        %v1293 = vrot.slane %v1227, 1
        %v1294 = vsel %vm694, %v1292, %v1293
        %v1295 = vsel %vm694, %v1291, %v1292
        %v1296 = vsel %vm694, %v1290, %v1291
        %v1297 = vsel %vm694, %v1289, %v1290
        %v1298 = vsel %vm694, %v1288, %v1289
        %v1299 = vsel %vm694, %v1287, %v1288
        %v1300 = vsel %vm694, %v1286, %v1287
        %v1301 = vsel %vm694, %v1285, %v1286
        %v1302 = vsel %vm694, %v1284, %v1285
        %v1303 = vsel %vm694, %v1283, %v1284
        %v1304 = vsel %vm694, %v1282, %v1283
        %v1305 = vsel %vm694, %v1281, %v1282
        %v1306 = vsel %vm694, %v1280, %v1281
        %v1307 = vsel %vm694, %v1279, %v1280
        %v1308 = vsel %vm694, %v1278, %v1279
        %v1309 = vsel %vm694, %v1293, %v1278
        %v1310 = vsel %vm662, %v1308, 0.0
        %v1311 = vsel %vm663, %v1307, 0.0
        %v1312 = vsel %vm664, %v1306, 0.0
        %v1313 = vsel %vm665, %v1305, 0.0
        %v1314 = vsel %vm666, %v1304, 0.0
        %v1315 = vsel %vm667, %v1303, 0.0
        %v1316 = vsel %vm668, %v1302, 0.0
        %v1317 = vsel %vm669, %v1301, 0.0
        %v1318 = vsel %vm670, %v1300, 0.0
        %v1319 = vsel %vm671, %v1299, 0.0
        %v1320 = vsel %vm672, %v1298, 0.0
        %v1321 = vsel %vm673, %v1297, 0.0
        %v1322 = vsel %vm674, %v1296, 0.0
        %v1323 = vsel %vm675, %v1295, 0.0
        %v1324 = vsel %vm676, %v1294, 0.0
        %v1325 = vsel %vm677, %v1309, 0.0
        %v1342 = vunpack.c.l.b16 %v1052
        %v1343 = vunpack.c.l.b16 %v1053
        %v1344 = vunpack.c.l.b16 %v1054
        %v1345 = vunpack.c.l.b16 %v1055
        %v1346 = vunpack.c.l.b16 %v1056
        %v1347 = vunpack.c.l.b16 %v1057
        %v1348 = vunpack.c.l.b16 %v1058
        %v1349 = vunpack.c.l.b16 %v1059
        %v1350 = vunpack.c.l.b16 %v1060
        %v1351 = vunpack.c.l.b16 %v1061
        %v1352 = vunpack.c.l.b16 %v1062
        %v1353 = vunpack.c.l.b16 %v1063
        %v1354 = vunpack.c.l.b16 %v1064
        %v1355 = vunpack.c.l.b16 %v1065
        %v1356 = vunpack.c.l.b16 %v1066
        %v1357 = vunpack.c.l.b16 %v1067
        %v1358 = vpack.c.b16 %v1343, %v1342
        %v1359 = vpack.c.b16 %v1345, %v1344
        %v1360 = vpack.c.b16 %v1347, %v1346
        %v1361 = vpack.c.b16 %v1349, %v1348
        %v1362 = vpack.c.b16 %v1351, %v1350
        %v1363 = vpack.c.b16 %v1353, %v1352
        %v1364 = vpack.c.b16 %v1355, %v1354
        %v1365 = vpack.c.b16 %v1357, %v1356
        %1374 = vmatprep.subr.bf16.mxu0 0
        %1375 = vmatpush1.bf16.msra.mxu0 %v1365
        %1376 = vmatprep.subr.bf16.mxu0 0
        %1377 = vmatpush1.bf16.msra.mxu0 %v1364
        %1378 = vmatprep.subr.bf16.mxu0 0
        %1379 = vmatpush1.bf16.msra.mxu0 %v1363
        %1380 = vmatprep.subr.bf16.mxu0 0
        %1381 = vmatpush1.bf16.msra.mxu0 %v1362
        %1382 = vmatprep.subr.bf16.mxu0 0
        %1383 = vmatpush1.bf16.msra.mxu0 %v1361
        %1384 = vmatprep.subr.bf16.mxu0 0
        %1385 = vmatpush1.bf16.msra.mxu0 %v1360
        %1386 = vmatprep.subr.bf16.mxu0 0
        %1387 = vmatpush1.bf16.msra.mxu0 %v1359
        %1388 = vmatprep.subr.bf16.mxu0 0
        %1389 = vmatpush1.bf16.msra.mxu0 %v1358
        %1390 = vmatprep.subr.bf16.mxu0 0
        %1391 = vmatpush2.bf16.msra.mxu0 0
        %1392 = vmatprep.subr.bf16.mxu0 0
        %1393 = vmatpush2.bf16.msra.mxu0 0
        %1394 = vmatprep.subr.bf16.mxu0 0
        %1395 = vmatpush2.bf16.msra.mxu0 0
        %1396 = vmatprep.subr.bf16.mxu0 0
        %1397 = vmatpush2.bf16.msra.mxu0 0
        %1398 = vmatprep.subr.bf16.mxu0 0
        %1399 = vmatpush2.bf16.msra.mxu0 0
        %1400 = vmatprep.subr.bf16.mxu0 0
        %1401 = vmatpush2.bf16.msra.mxu0 0
        %1402 = vmatprep.subr.bf16.mxu0 0
        %1403 = vmatpush2.bf16.msra.mxu0 0
        %1404 = vmatprep.subr.bf16.mxu0 0
        %1405 = vmatpush2.bf16.msra.mxu0 0
        %1406 = vmatprep.mubr.bf16.mxu0 0
        %1407 = vmatmul.mubr.bf16.gmra.mxu0 %v882
        %v1408 = vpop.f32.mrf.mxu0
        %v1409 = vadd.f32 %v1262, %v1408
        %v1410 = vpop.f32.mrf.mxu0
        %v1411 = vpop.f32.mrf.mxu0
        %v1412 = vadd.f32 %v1263, %v1411
        %v1413 = vpop.f32.mrf.mxu0
        %1414 = vmatprep.mubr.bf16.mxu0 0
        %1415 = vmatmul.mubr.bf16.gmra.mxu0 %v883
        %v1416 = vpop.f32.mrf.mxu0
        %v1417 = vadd.f32 %v1264, %v1416
        %v1418 = vpop.f32.mrf.mxu0
        %v1419 = vpop.f32.mrf.mxu0
        %v1420 = vadd.f32 %v1265, %v1419
        %v1421 = vpop.f32.mrf.mxu0
        %1422 = vmatprep.mubr.bf16.mxu0 0
        %1423 = vmatmul.mubr.bf16.gmra.mxu0 %v884
        %v1424 = vpop.f32.mrf.mxu0
        %v1425 = vadd.f32 %v1266, %v1424
        %v1426 = vpop.f32.mrf.mxu0
        %v1427 = vpop.f32.mrf.mxu0
        %v1428 = vadd.f32 %v1267, %v1427
        %v1429 = vpop.f32.mrf.mxu0
        %1430 = vmatprep.mubr.bf16.mxu0 0
        %1431 = vmatmul.mubr.bf16.gmra.mxu0 %v885
        %v1432 = vpop.f32.mrf.mxu0
        %v1433 = vadd.f32 %v1268, %v1432
        %v1434 = vpop.f32.mrf.mxu0
        %v1435 = vpop.f32.mrf.mxu0
        %v1436 = vadd.f32 %v1269, %v1435
        %v1437 = vpop.f32.mrf.mxu0
        %1438 = vmatprep.mubr.bf16.mxu0 0
        %1439 = vmatmul.mubr.bf16.gmra.mxu0 %v886
        %v1440 = vpop.f32.mrf.mxu0
        %v1441 = vadd.f32 %v1270, %v1440
        %v1442 = vpop.f32.mrf.mxu0
        %v1443 = vpop.f32.mrf.mxu0
        %v1444 = vadd.f32 %v1271, %v1443
        %v1445 = vpop.f32.mrf.mxu0
        %1446 = vmatprep.mubr.bf16.mxu0 0
        %1447 = vmatmul.mubr.bf16.gmra.mxu0 %v887
        %v1448 = vpop.f32.mrf.mxu0
        %v1449 = vadd.f32 %v1272, %v1448
        %v1450 = vpop.f32.mrf.mxu0
        %v1451 = vpop.f32.mrf.mxu0
        %v1452 = vadd.f32 %v1273, %v1451
        %v1453 = vpop.f32.mrf.mxu0
        %1454 = vmatprep.mubr.bf16.mxu0 0
        %1455 = vmatmul.mubr.bf16.gmra.mxu0 %v888
        %v1456 = vpop.f32.mrf.mxu0
        %v1457 = vadd.f32 %v1274, %v1456
        %v1458 = vpop.f32.mrf.mxu0
        %v1459 = vpop.f32.mrf.mxu0
        %v1460 = vadd.f32 %v1275, %v1459
        %v1461 = vpop.f32.mrf.mxu0
        %1462 = vmatprep.mubr.bf16.mxu0 0
        %1463 = vmatmul.mubr.bf16.gmra.mxu0 %v889
        %v1464 = vpop.f32.mrf.mxu0
        %v1465 = vadd.f32 %v1276, %v1464
        %v1466 = vpop.f32.mrf.mxu0
        %v1467 = vpop.f32.mrf.mxu0
        %v1468 = vadd.f32 %v1277, %v1467
        %v1469 = vpop.f32.mrf.mxu0
        %1470 = vdwg.mxu0
        %v1471 = vadd.f32 %v1409, %v1310
        %v1472 = vadd.f32 %v1412, %v1311
        %v1473 = vadd.f32 %v1417, %v1312
        %v1474 = vadd.f32 %v1420, %v1313
        %v1475 = vadd.f32 %v1425, %v1314
        %v1476 = vadd.f32 %v1428, %v1315
        %v1477 = vadd.f32 %v1433, %v1316
        %v1478 = vadd.f32 %v1436, %v1317
        %v1479 = vadd.f32 %v1441, %v1318
        %v1480 = vadd.f32 %v1444, %v1319
        %v1481 = vadd.f32 %v1449, %v1320
        %v1482 = vadd.f32 %v1452, %v1321
        %v1483 = vadd.f32 %v1457, %v1322
        %v1484 = vadd.f32 %v1460, %v1323
        %v1485 = vadd.f32 %v1465, %v1324
        %v1486 = vadd.f32 %v1468, %v1325
        %v1487 = vld [vmem:[%s4] sm:$0x1]
        %v1489 = vlaneseq
        %v1490 = vshrl.u32 %v1489, 7
        %v1491 = vsub.s32 0, %v1490
        %v1492 = vrot.slane %v1487, %v1491
        %v1494 = vadd.f32 %v1471, %v1492
        %v1495 = vadd.f32 %v1472, %v1492
        %v1496 = vadd.f32 %v1473, %v1492
        %v1497 = vadd.f32 %v1474, %v1492
        %v1498 = vadd.f32 %v1475, %v1492
        %v1499 = vadd.f32 %v1476, %v1492
        %v1500 = vadd.f32 %v1477, %v1492
        %v1501 = vadd.f32 %v1478, %v1492
        %v1502 = vadd.f32 %v1479, %v1492
        %v1503 = vadd.f32 %v1480, %v1492
        %v1504 = vadd.f32 %v1481, %v1492
        %v1505 = vadd.f32 %v1482, %v1492
        %v1506 = vadd.f32 %v1483, %v1492
        %v1507 = vadd.f32 %v1484, %v1492
        %v1508 = vadd.f32 %v1485, %v1492
        %v1509 = vadd.f32 %v1486, %v1492
        %v1510 = vld [vmem:[%s5] sm:$0xf]
        %v1511 = vld [vmem:[%s6] sm:$0x1]
        %v1513 = vlaneseq
        %v1514 = vshrl.u32 %v1513, 7
        %v1515 = vsub.s32 0, %v1514
        %v1516 = vrot.slane %v1511, %v1515
        %v1519 = vsel %vm375, %v1510, 0
        %1521 = vmatprep.subr.bf16.mxu0 0
        %1522 = vmatpush1.bf16.msra.mxu0 0
        %1523 = vmatprep.subr.bf16.mxu0 0
        %1524 = vmatpush1.bf16.msra.mxu0 0
        %1525 = vmatprep.subr.bf16.mxu0 0
        %1526 = vmatpush1.bf16.msra.mxu0 0
        %1527 = vmatprep.subr.bf16.mxu0 0
        %1528 = vmatpush1.bf16.msra.mxu0 0
        %1529 = vmatprep.subr.bf16.mxu0 0
        %1530 = vmatpush1.bf16.msra.mxu0 0
        %1531 = vmatprep.subr.bf16.mxu0 0
        %1532 = vmatpush1.bf16.msra.mxu0 0
        %1533 = vmatprep.subr.bf16.mxu0 0
        %1534 = vmatpush1.bf16.msra.mxu0 0
        %1535 = vmatprep.subr.bf16.mxu0 0
        %1536 = vmatpush1.bf16.msra.mxu0 %v1519
        %1537 = vmatprep.subr.bf16.mxu0 0
        %1538 = vmatpush2.bf16.msra.mxu0 0
        %1539 = vmatprep.subr.bf16.mxu0 0
        %1540 = vmatpush2.bf16.msra.mxu0 0
        %1541 = vmatprep.subr.bf16.mxu0 0
        %1542 = vmatpush2.bf16.msra.mxu0 0
        %1543 = vmatprep.subr.bf16.mxu0 0
        %1544 = vmatpush2.bf16.msra.mxu0 0
        %1545 = vmatprep.subr.bf16.mxu0 0
        %1546 = vmatpush2.bf16.msra.mxu0 0
        %1547 = vmatprep.subr.bf16.mxu0 0
        %1548 = vmatpush2.bf16.msra.mxu0 0
        %1549 = vmatprep.subr.bf16.mxu0 0
        %1550 = vmatpush2.bf16.msra.mxu0 0
        %1551 = vmatprep.subr.bf16.mxu0 0
        %1552 = vmatpush2.bf16.msra.mxu0 0
        %1553 = vmatprep.mubr.bf16.mxu0 0
        %1554 = vmatmul.mubr.bf16.gmra.mxu0 %v352
        %v1555 = vpop.f32.mrf.mxu0
        %v1556 = vadd.f32 %v1516, %v1555
        %v1557 = vpop.f32.mrf.mxu0
        %v1558 = vpop.f32.mrf.mxu0
        %v1559 = vadd.f32 %v1516, %v1558
        %v1560 = vpop.f32.mrf.mxu0
        %1561 = vmatprep.mubr.bf16.mxu0 0
        %1562 = vmatmul.mubr.bf16.gmra.mxu0 %v355
        %v1563 = vpop.f32.mrf.mxu0
        %v1564 = vadd.f32 %v1516, %v1563
        %v1565 = vpop.f32.mrf.mxu0
        %v1566 = vpop.f32.mrf.mxu0
        %v1567 = vadd.f32 %v1516, %v1566
        %v1568 = vpop.f32.mrf.mxu0
        %1569 = vmatprep.mubr.bf16.mxu0 0
        %1570 = vmatmul.mubr.bf16.gmra.mxu0 %v358
        %v1571 = vpop.f32.mrf.mxu0
        %v1572 = vadd.f32 %v1516, %v1571
        %v1573 = vpop.f32.mrf.mxu0
        %v1574 = vpop.f32.mrf.mxu0
        %v1575 = vadd.f32 %v1516, %v1574
        %v1576 = vpop.f32.mrf.mxu0
        %1577 = vmatprep.mubr.bf16.mxu0 0
        %1578 = vmatmul.mubr.bf16.gmra.mxu0 %v361
        %v1579 = vpop.f32.mrf.mxu0
        %v1580 = vadd.f32 %v1516, %v1579
        %v1581 = vpop.f32.mrf.mxu0
        %v1582 = vpop.f32.mrf.mxu0
        %v1583 = vadd.f32 %v1516, %v1582
        %v1584 = vpop.f32.mrf.mxu0
        %1585 = vmatprep.mubr.bf16.mxu0 0
        %1586 = vmatmul.mubr.bf16.gmra.mxu0 %v364
        %v1587 = vpop.f32.mrf.mxu0
        %v1588 = vadd.f32 %v1516, %v1587
        %v1589 = vpop.f32.mrf.mxu0
        %v1590 = vpop.f32.mrf.mxu0
        %v1591 = vadd.f32 %v1516, %v1590
        %v1592 = vpop.f32.mrf.mxu0
        %1593 = vmatprep.mubr.bf16.mxu0 0
        %1594 = vmatmul.mubr.bf16.gmra.mxu0 %v367
        %v1595 = vpop.f32.mrf.mxu0
        %v1596 = vadd.f32 %v1516, %v1595
        %v1597 = vpop.f32.mrf.mxu0
        %v1598 = vpop.f32.mrf.mxu0
        %v1599 = vadd.f32 %v1516, %v1598
        %v1600 = vpop.f32.mrf.mxu0
        %1601 = vmatprep.mubr.bf16.mxu0 0
        %1602 = vmatmul.mubr.bf16.gmra.mxu0 %v370
        %v1603 = vpop.f32.mrf.mxu0
        %v1604 = vadd.f32 %v1516, %v1603
        %v1605 = vpop.f32.mrf.mxu0
        %v1606 = vpop.f32.mrf.mxu0
        %v1607 = vadd.f32 %v1516, %v1606
        %v1608 = vpop.f32.mrf.mxu0
        %1609 = vmatprep.mubr.bf16.mxu0 0
        %1610 = vmatmul.mubr.bf16.gmra.mxu0 %v373
        %v1611 = vpop.f32.mrf.mxu0
        %v1612 = vadd.f32 %v1516, %v1611
        %v1613 = vpop.f32.mrf.mxu0
        %v1614 = vpop.f32.mrf.mxu0
        %v1615 = vadd.f32 %v1516, %v1614
        %v1616 = vpop.f32.mrf.mxu0
        %1617 = vdwg.mxu0
        %v1618 = vadd.f32 %v1494, %v1556
        %v1619 = vadd.f32 %v1495, %v1559
        %v1620 = vadd.f32 %v1496, %v1564
        %v1621 = vadd.f32 %v1497, %v1567
        %v1622 = vadd.f32 %v1498, %v1572
        %v1623 = vadd.f32 %v1499, %v1575
        %v1624 = vadd.f32 %v1500, %v1580
        %v1625 = vadd.f32 %v1501, %v1583
        %v1626 = vadd.f32 %v1502, %v1588
        %v1627 = vadd.f32 %v1503, %v1591
        %v1628 = vadd.f32 %v1504, %v1596
        %v1629 = vadd.f32 %v1505, %v1599
        %v1630 = vadd.f32 %v1506, %v1604
        %v1631 = vadd.f32 %v1507, %v1607
        %v1632 = vadd.f32 %v1508, %v1612
        %v1633 = vadd.f32 %v1509, %v1615
        %v1634 = vmax.f32 %v1618, 0.0
        %v1635 = vmax.f32 %v1619, 0.0
        %v1636 = vmax.f32 %v1620, 0.0
        %v1637 = vmax.f32 %v1621, 0.0
        %v1638 = vmax.f32 %v1622, 0.0
        %v1639 = vmax.f32 %v1623, 0.0
        %v1640 = vmax.f32 %v1624, 0.0
        %v1641 = vmax.f32 %v1625, 0.0
        %v1642 = vmax.f32 %v1626, 0.0
        %v1643 = vmax.f32 %v1627, 0.0
        %v1644 = vmax.f32 %v1628, 0.0
        %v1645 = vmax.f32 %v1629, 0.0
        %v1646 = vmax.f32 %v1630, 0.0
        %v1647 = vmax.f32 %v1631, 0.0
        %v1648 = vmax.f32 %v1632, 0.0
        %v1649 = vmax.f32 %v1633, 0.0
        %v1650 = vpack.c.bf16 %v1635, %v1634
        %v1651 = vpack.c.bf16 %v1637, %v1636
        %v1652 = vpack.c.bf16 %v1639, %v1638
        %v1653 = vpack.c.bf16 %v1641, %v1640
        %v1654 = vpack.c.bf16 %v1643, %v1642
        %v1655 = vpack.c.bf16 %v1645, %v1644
        %v1656 = vpack.c.bf16 %v1647, %v1646
        %v1657 = vpack.c.bf16 %v1649, %v1648
        %v1666 = vunpack.c.l.b16 %v1650
        %v1667 = vunpack.c.h.b16 %v1650
        %v1668 = vunpack.c.l.b16 %v1651
        %v1669 = vunpack.c.h.b16 %v1651
        %v1670 = vunpack.c.l.b16 %v1652
        %v1671 = vunpack.c.h.b16 %v1652
        %v1672 = vunpack.c.l.b16 %v1653
        %v1673 = vunpack.c.h.b16 %v1653
        %v1674 = vunpack.c.l.b16 %v1654
        %v1675 = vunpack.c.h.b16 %v1654
        %v1676 = vunpack.c.l.b16 %v1655
        %v1677 = vunpack.c.h.b16 %v1655
        %v1678 = vunpack.c.l.b16 %v1656
        %v1679 = vunpack.c.h.b16 %v1656
        %v1680 = vunpack.c.l.b16 %v1657
        %v1681 = vunpack.c.h.b16 %v1657
        %v1682 = vpack.c.b16 %v1666, %v1666
        %v1683 = vpack.c.b16 %v1667, %v1667
        %v1684 = vpack.c.b16 %v1668, %v1668
        %v1685 = vpack.c.b16 %v1669, %v1669
        %v1686 = vpack.c.b16 %v1670, %v1670
        %v1687 = vpack.c.b16 %v1671, %v1671
        %v1688 = vpack.c.b16 %v1672, %v1672
        %v1689 = vpack.c.b16 %v1673, %v1673
        %v1690 = vpack.c.b16 %v1674, %v1674
        %v1691 = vpack.c.b16 %v1675, %v1675
        %v1692 = vpack.c.b16 %v1676, %v1676
        %v1693 = vpack.c.b16 %v1677, %v1677
        %v1694 = vpack.c.b16 %v1678, %v1678
        %v1695 = vpack.c.b16 %v1679, %v1679
        %v1696 = vpack.c.b16 %v1680, %v1680
        %v1697 = vpack.c.b16 %v1681, %v1681
        %1714 = vst [vmem:[%s286] sm:$0xf] %v1682
        %1715 = vst [vmem:[%s286 + $0x4] sm:$0xf] %v1683
        %1716 = vst [vmem:[%s286 + $0x8] sm:$0xf] %v1684
        %1717 = vst [vmem:[%s286 + $0xc] sm:$0xf] %v1685
        %1718 = vst [vmem:[%s286 + $0x10] sm:$0xf] %v1686
        %1719 = vst [vmem:[%s286 + $0x14] sm:$0xf] %v1687
        %1720 = vst [vmem:[%s286 + $0x18] sm:$0xf] %v1688
        %1721 = vst [vmem:[%s286 + $0x1c] sm:$0xf] %v1689
        %1722 = vst [vmem:[%s286 + $0x20] sm:$0xf] %v1690
        %1723 = vst [vmem:[%s286 + $0x24] sm:$0xf] %v1691
        %1724 = vst [vmem:[%s286 + $0x28] sm:$0xf] %v1692
        %1725 = vst [vmem:[%s286 + $0x2c] sm:$0xf] %v1693
        %1726 = vst [vmem:[%s286 + $0x30] sm:$0xf] %v1694
        %1727 = vst [vmem:[%s286 + $0x34] sm:$0xf] %v1695
        %1728 = vst [vmem:[%s286 + $0x38] sm:$0xf] %v1696
        %1729 = vst [vmem:[%s286 + $0x3c] sm:$0xf] %v1697
        %s1730 = sand.u32 %s182, 1
        %s1731 = scalar_lea.sflag [#allocation4], %s1730
        %s1732 = sand.u32 %s182, 1
        %s1733 = smul.addr %s1732, 64
        %s1734 = scalar_lea.vmem [#allocation5], %s1733
        // Predicated region
        $region53: #{tpu_custom_call.1} parent=47 // pred_check
          %p1735 = pneg %p192
        $region54: #{tpu_custom_call.1} parent=47 // pred_check_branch
          %1737 = sbr.rel (%p1735) target = $region56
        $region55: #{tpu_custom_call.1} parent=47 // pred_region
          %s1739 = ssub.s32 1024, 1024
          %1740 = vsyncadd %s1731, %s1739
          %s1741 = smul.addr %s22, 16
          %s1742 = smul.addr %s1741, 64
          %s1743 = scalar_lea.hbm %s7, %s1742
          %s1744 = sshll.u32 %s1734, 4
          %s1745 = int_to_ptr.vmem [resolvable:$true] %s1744
          %1750 = dma.vmem_to_hbm [thread:$0]  %s1745, 1024, %s1743, %s1731, 64, 64, 4
        $region56: #{tpu_custom_call.1} parent=47 // pred_fallthru
          _
      $region48: #{tpu_custom_call.1} parent=5 // pred_fallthru
        _
      %p1751 = scmp.le.s32.totalorder 2, %s17
      // Predicated region
      $region57: #{tpu_custom_call.1} parent=5 // pred_check
        %p1752 = pneg %p1751
      $region58: #{tpu_custom_call.1} parent=5 // pred_check_branch
        %1754 = sbr.rel (%p1752) target = $region60
      $region59: #{tpu_custom_call.1} parent=5 // pred_region
        %s1755 = ssub.s32 %s17, 2
        // Predicated region
        $region61: #{tpu_custom_call.1} parent=59 // pred_check
          %p1756 = pneg %p198
        $region62: #{tpu_custom_call.1} parent=59 // pred_check_branch
          %1758 = sbr.rel (%p1756) target = $region64
        $region63: #{tpu_custom_call.1} parent=59 // pred_region
          %s1759 = sand.u32 %s183, 1
          %s1760 = scalar_lea.sflag [#allocation4], %s1759
          %s1761 = sand.u32 %s183, 1
          %s1762 = smul.addr %s1761, 64
          %s1763 = scalar_lea.vmem [#allocation5], %s1762
          %1764 = dma.done %s1760, 1024
        $region64: #{tpu_custom_call.1} parent=59 // pred_fallthru
          _
      $region60: #{tpu_custom_call.1} parent=5 // pred_fallthru
        _
    $region6: #{tpu_custom_call.1} parent=1 // loop_footer
      %s21 = sadd.s32 1, %s17
    $region7: #{tpu_custom_call.1} parent=1 // loop_footer_branch
      %16 = sbr.rel target = $region3
    $region8: #{tpu_custom_call.1} parent=1 // loop_exit
      _
    %1765 = vsyncpa [#allocation3], 1
    %s1766 = scalar_lea.sflag [#allocation3], 1
    %1767 = vsyncpa %s1766, 1
    %1768 = vsyncpa [#allocation4], 1
    %s1769 = scalar_lea.sflag [#allocation4], 1
    %1770 = vsyncpa %s1769, 1

</llo_original>
